<compile_context>
chip_gen: v7x
topology: tpu7x:2x2x1
jax: 0.10.0
libtpu: 0.0.40
codegen_flags: <defaults>
</compile_context>

<pallas_src>
import math
import functools

import jax
import jax.numpy as jnp
from jax import lax
from jax.experimental import pallas as pl
from jax.experimental.pallas import tpu as pltpu


def _vmem_limit_bytes():
    """Half of physical VMEM, clamped to [32 MiB, 100 MiB]; safe fallback 64 MiB."""
    cap = 64 * 1024 * 1024
    try:
        cap = int(pltpu.get_tpu_info().vmem_capacity_bytes)
    except Exception:
        pass
    return int(max(32 * 1024 * 1024, min(cap // 2, 100 * 1024 * 1024)))


def _self_attention_kernel(x_ref, pos_ref, w_qk_ref, wv_ref, o_ref, *,
                           num_heads, head_dim, block_b):
    """One grid step == `block_b` batch elements.

    x_ref, pos_ref, o_ref : (Bt, N, D) VMEM tiles
    w_qk_ref              : (D, 2D) bf16, columns = [wq^T * sqrt(head_dim) | wk^T]
    wv_ref                : (D, D)  bf16 (= wv^T)
    """
    D = num_heads * head_dim

    x = x_ref[...]                       # (Bt, N, D) f32
    pos = pos_ref[...]                   # (Bt, N, D) f32

    # q = k = input + pos (f32 add), v = input. bf16 MXU operands.
    qk_in = (x + pos).astype(jnp.bfloat16)
    v_in = x.astype(jnp.bfloat16)

    w_qk = w_qk_ref[...]                 # (D, 2D) bf16, (in, out) layout
    w_v = wv_ref[...]                    # (D, D)  bf16, (in, out) layout

    # block_b and num_heads are small static constants -> unrolled at trace time.
    # For DETR-scale N, heads/queries would move to a grid axis with an online
    # softmax over key tiles to bound live (N, N) intermediates and VMEM.
    for b in range(block_b):
        # Fused Q/K projection (one wide MXU matmul) + V projection, f32 accumulate.
        qk = jnp.dot(qk_in[b], w_qk, preferred_element_type=jnp.float32)   # (N, 2D)
        v = jnp.dot(v_in[b], w_v, preferred_element_type=jnp.float32)      # (N, D)

        # sqrt(head_dim) scale was folded into the Q weight -> q is pre-scaled.
        q = qk[:, :D].astype(jnp.bfloat16)
        k = qk[:, D:].astype(jnp.bfloat16)
        v = v.astype(jnp.bfloat16)

        head_outs = []
        for h in range(num_heads):
            lo = h * head_dim
            q_h = q[:, lo:lo + head_dim]        # (N, hd) bf16, pre-scaled
            k_h = k[:, lo:lo + head_dim]        # (N, hd) bf16
            v_h = v[:, lo:lo + head_dim]        # (N, hd) bf16

            # logits = q_h @ k_h^T, contracting last dims (no materialized transpose).
            logits = lax.dot_general(q_h, k_h, (((1,), (1,)), ((), ())),
                                     preferred_element_type=jnp.float32)   # (N, N)

            # Numerically-stable softmax; normalization deferred to (N, hd) output.
            m = jnp.max(logits, axis=-1, keepdims=True)
            p = jnp.exp(logits - m)                                        # f32 (v5e EUP)
            denom = jnp.sum(p, axis=-1, keepdims=True)

            out_h = jnp.dot(p.astype(jnp.bfloat16), v_h,
                            preferred_element_type=jnp.float32)            # (N, hd) f32
            inv = pl.reciprocal(denom, approx=True)                        # EUP slot
            head_outs.append(out_h * inv)

        # Assemble all heads in registers; single lane-dense (N, D) store + one cast.
        o_ref[b] = jnp.concatenate(head_outs, axis=-1).astype(o_ref.dtype)


def self_attention(x, pos, wq, wk, wv, *, num_heads, block_b=None):
    """x, pos: (B, N, D); wq/wk/wv: (D, D) in nn.Linear (out, in) layout."""
    B, N, D = x.shape
    assert D % num_heads == 0
    head_dim = D // num_heads

    if block_b is None:
        block_b = 1
        for cand in range(min(B, 8), 0, -1):   # largest divisor of B, capped at 8
            if B % cand == 0:
                block_b = cand
                break
    assert B % block_b == 0

    # Reference divides logits by head_dim**(-0.5) == multiplies by sqrt(head_dim);
    # fold that scale into the Q weight. Pre-transpose to (in, out) on the host so
    # the kernel's matmuls need no weight transpose; fuse Q/K; cast to bf16.
    scale = head_dim ** 0.5
    w_qk = jnp.concatenate([wq.T * scale, wk.T], axis=1).astype(jnp.bfloat16)  # (D, 2D)
    wv_t = wv.T.astype(jnp.bfloat16)                                            # (D, D)

    kernel = functools.partial(
        _self_attention_kernel, num_heads=num_heads, head_dim=head_dim,
        block_b=block_b)

    return pl.pallas_call(
        kernel,
        out_shape=jax.ShapeDtypeStruct((B, N, D), x.dtype),
        grid_spec=pltpu.PrefetchScalarGridSpec(
            num_scalar_prefetch=0,
            grid=(B // block_b,),
            in_specs=[
                pl.BlockSpec((block_b, N, D), lambda b: (b, 0, 0)),   # x
                pl.BlockSpec((block_b, N, D), lambda b: (b, 0, 0)),   # pos
                pl.BlockSpec((D, 2 * D), lambda b: (0, 0)),           # [wq^T*sqrt(hd)|wk^T]
                pl.BlockSpec((D, D), lambda b: (0, 0)),               # wv^T
            ],
            out_specs=pl.BlockSpec((block_b, N, D), lambda b: (b, 0, 0)),
        ),
        compiler_params=pltpu.CompilerParams(
            dimension_semantics=("parallel",),
            vmem_limit_bytes=_vmem_limit_bytes(),
        ),
    )(x, pos, w_qk, wv_t)


def _reference_f32(x, pos, wq, wk, wv, num_heads):
    """Pure-f32 JAX mirror of the PyTorch SelfAttention module."""
    B, N, D = x.shape
    hd = D // num_heads
    qk_in = x + pos
    q = qk_in @ wq.T
    k = qk_in @ wk.T
    v = x @ wv.T

    def split(t):
        return t.reshape(B, N, num_heads, hd).transpose(0, 2, 1, 3)

    q, k, v = split(q), split(k), split(v)
    attn = jnp.einsum("bhnd,bhmd->bhnm", q, k) / (hd ** (-0.5))
    attn = jax.nn.softmax(attn, axis=-1)
    out = jnp.einsum("bhnm,bhmd->bhnd", attn, v)
    return out.transpose(0, 2, 1, 3).reshape(B, N, D)


def _reference_matched(x, pos, wq, wk, wv, num_heads):
    """Same math as the kernel (bf16 matmul operands, f32 accumulate/softmax),
    expressed in pure JAX — isolates structural correctness from bf16 rounding."""
    B, N, D = x.shape
    hd = D // num_heads
    scale = hd ** 0.5
    w_qk = jnp.concatenate([wq.T * scale, wk.T], axis=1).astype(jnp.bfloat16)
    wv_t = wv.T.astype(jnp.bfloat16)

    qk_in = (x + pos).astype(jnp.bfloat16)
    v_in = x.astype(jnp.bfloat16)
    qk = jnp.einsum("bnd,do->bno", qk_in, w_qk, preferred_element_type=jnp.float32)
    v = jnp.einsum("bnd,do->bno", v_in, wv_t, preferred_element_type=jnp.float32)
    q = qk[..., :D].astype(jnp.bfloat16)
    k = qk[..., D:].astype(jnp.bfloat16)
    v = v.astype(jnp.bfloat16)

    def split(t):
        return t.reshape(B, N, num_heads, hd).transpose(0, 2, 1, 3)

    q, k, v = split(q), split(k), split(v)
    logits = jnp.einsum("bhnd,bhmd->bhnm", q, k, preferred_element_type=jnp.float32)
    m = jnp.max(logits, axis=-1, keepdims=True)
    p = jnp.exp(logits - m)
    denom = jnp.sum(p, axis=-1, keepdims=True)
    out = jnp.einsum("bhnm,bhmd->bhnd", p.astype(jnp.bfloat16), v,
                     preferred_element_type=jnp.float32) / denom
    return out.transpose(0, 2, 1, 3).reshape(B, N, D).astype(x.dtype)


if __name__ == "__main__":
    B, N, D, H = 2, 8, 32, 4

    key = jax.random.PRNGKey(0)
    kx, kp, kq, kk, kv = jax.random.split(key, 5)

    x = jax.random.normal(kx, (B, N, D), dtype=jnp.float32)
    pos = jax.random.normal(kp, (B, N, D), dtype=jnp.float32)

    # nn.Linear(D, D, bias=False) default init: U(-1/sqrt(D), 1/sqrt(D)), (out, in)
    bound = 1.0 / math.sqrt(D)
    wq = jax.random.uniform(kq, (D, D), jnp.float32, -bound, bound)
    wk = jax.random.uniform(kk, (D, D), jnp.float32, -bound, bound)
    wv = jax.random.uniform(kv, (D, D), jnp.float32, -bound, bound)

    out = jax.block_until_ready(self_attention(x, pos, wq, wk, wv, num_heads=H))
    assert out.shape == (B, N, D)

    ref_m = _reference_matched(x, pos, wq, wk, wv, H)
    ref_f = _reference_f32(x, pos, wq, wk, wv, H)

    # Strict structural check vs a matched-precision reference (remaining diff:
    # accumulation order + approx reciprocal).
    assert jnp.allclose(out, ref_m, atol=2e-2, rtol=2e-2), (
        "mismatch vs matched-precision reference, max abs err = "
        f"{jnp.max(jnp.abs(out - ref_m))}")
    # Loose sanity check vs the pure-f32 PyTorch-equivalent math; the gap is the
    # intentional bf16 MXU-operand quantization (the module's *sqrt(head_dim)
    # logit scaling amplifies rounding).
    assert jnp.allclose(out, ref_f, atol=2.5e-1, rtol=1e-1), (
        "mismatch vs f32 reference, max abs err = "
        f"{jnp.max(jnp.abs(out - ref_f))}")

    print("KERNEL_OK")
</pallas_src>

<mosaic_0001>
module attributes {stable_mosaic.version = 11 : i64} {
  func.func @_self_attention_kernel(%arg0: i32, %arg1: memref<2x8x32xf32, #tpu.memory_space<vmem>>, %arg2: memref<2x8x32xf32, #tpu.memory_space<vmem>>, %arg3: memref<32x64xbf16, #tpu.memory_space<vmem>>, %arg4: memref<32x32xbf16, #tpu.memory_space<vmem>>, %arg5: memref<2x8x32xf32, #tpu.memory_space<vmem>>) attributes {dimension_semantics = [#tpu.dimension_semantics<parallel>], iteration_bounds = array<i64: 1>, scalar_prefetch = 0 : i64, scratch_operands = 0 : i64, tpu.core_type = #tpu.core_type<tc>, window_params = [{transform_indices = @transform_0, window_bounds = array<i64: 2, 8, 32>}, {transform_indices = @transform_1, window_bounds = array<i64: 2, 8, 32>}, {pipeline_mode = #tpu.pipeline_mode<synchronous>, transform_indices = @transform_2, window_bounds = array<i64: 32, 64>}, {pipeline_mode = #tpu.pipeline_mode<synchronous>, transform_indices = @transform_3, window_bounds = array<i64: 32, 32>}, {transform_indices = @transform_4, window_bounds = array<i64: 2, 8, 32>}]} {
    %c0 = arith.constant 0 : index
    %c0_0 = arith.constant 0 : index
    %c0_1 = arith.constant 0 : index
    %0 = vector.load %arg1[%c0, %c0_0, %c0_1] : memref<2x8x32xf32, #tpu.memory_space<vmem>>, vector<2x8x32xf32>
    %c0_2 = arith.constant 0 : index
    %c0_3 = arith.constant 0 : index
    %c0_4 = arith.constant 0 : index
    %1 = vector.load %arg2[%c0_2, %c0_3, %c0_4] : memref<2x8x32xf32, #tpu.memory_space<vmem>>, vector<2x8x32xf32>
    %2 = arith.addf %0, %1 : vector<2x8x32xf32>
    %3 = arith.truncf %2 : vector<2x8x32xf32> to vector<2x8x32xbf16>
    %4 = arith.truncf %0 : vector<2x8x32xf32> to vector<2x8x32xbf16>
    %c0_5 = arith.constant 0 : index
    %c0_6 = arith.constant 0 : index
    %5 = vector.load %arg3[%c0_5, %c0_6] : memref<32x64xbf16, #tpu.memory_space<vmem>>, vector<32x64xbf16>
    %c0_7 = arith.constant 0 : index
    %c0_8 = arith.constant 0 : index
    %6 = vector.load %arg4[%c0_7, %c0_8] : memref<32x32xbf16, #tpu.memory_space<vmem>>, vector<32x32xbf16>
    %7 = vector.extract_strided_slice %3 {offsets = [0, 0, 0], sizes = [1, 8, 32], strides = [1, 1, 1]} : vector<2x8x32xbf16> to vector<1x8x32xbf16>
    %8 = vector.shape_cast %7 : vector<1x8x32xbf16> to vector<8x32xbf16>
    %cst = arith.constant dense<0.000000e+00> : vector<8x64xf32>
    %9 = tpu.matmul %8, %5, %cst {dimension_numbers = #tpu.dot_dimension_numbers<[1], [0], [0], [1], [0, 0, 1, 1], [], []>} : vector<8x32xbf16>, vector<32x64xbf16>, vector<8x64xf32> -> vector<8x64xf32>
    %10 = vector.extract_strided_slice %4 {offsets = [0, 0, 0], sizes = [1, 8, 32], strides = [1, 1, 1]} : vector<2x8x32xbf16> to vector<1x8x32xbf16>
    %11 = vector.shape_cast %10 : vector<1x8x32xbf16> to vector<8x32xbf16>
    %cst_9 = arith.constant dense<0.000000e+00> : vector<8x32xf32>
    %12 = tpu.matmul %11, %6, %cst_9 {dimension_numbers = #tpu.dot_dimension_numbers<[1], [0], [0], [1], [0, 0, 1, 1], [], []>} : vector<8x32xbf16>, vector<32x32xbf16>, vector<8x32xf32> -> vector<8x32xf32>
    %13 = vector.extract_strided_slice %9 {offsets = [0, 0], sizes = [8, 32], strides = [1, 1]} : vector<8x64xf32> to vector<8x32xf32>
    %14 = arith.truncf %13 : vector<8x32xf32> to vector<8x32xbf16>
    %15 = vector.extract_strided_slice %9 {offsets = [0, 32], sizes = [8, 32], strides = [1, 1]} : vector<8x64xf32> to vector<8x32xf32>
    %16 = arith.truncf %15 : vector<8x32xf32> to vector<8x32xbf16>
    %17 = arith.truncf %12 : vector<8x32xf32> to vector<8x32xbf16>
    %18 = vector.extract_strided_slice %14 {offsets = [0, 0], sizes = [8, 8], strides = [1, 1]} : vector<8x32xbf16> to vector<8x8xbf16>
    %19 = vector.extract_strided_slice %16 {offsets = [0, 0], sizes = [8, 8], strides = [1, 1]} : vector<8x32xbf16> to vector<8x8xbf16>
    %20 = vector.extract_strided_slice %17 {offsets = [0, 0], sizes = [8, 8], strides = [1, 1]} : vector<8x32xbf16> to vector<8x8xbf16>
    %cst_10 = arith.constant dense<0.000000e+00> : vector<8x8xf32>
    %21 = tpu.matmul %18, %19, %cst_10 {dimension_numbers = #tpu.dot_dimension_numbers<[1], [1], [0], [0], [0, 0, 1, 0], [], []>} : vector<8x8xbf16>, vector<8x8xbf16>, vector<8x8xf32> -> vector<8x8xf32>
    %cst_11 = arith.constant dense<0xFF800000> : vector<8xf32>
    %22 = vector.multi_reduction <maximumf>, %21, %cst_11 [1] : vector<8x8xf32> to vector<8xf32>
    %23 = vector.shape_cast %22 : vector<8xf32> to vector<8x1xf32>
    %24 = vector.broadcast %23 : vector<8x1xf32> to vector<8x8xf32>
    %25 = arith.subf %21, %24 : vector<8x8xf32>
    %26 = math.exp %25 : vector<8x8xf32>
    %cst_12 = arith.constant dense<0.000000e+00> : vector<8xf32>
    %27 = vector.multi_reduction <add>, %26, %cst_12 [1] : vector<8x8xf32> to vector<8xf32>
    %28 = vector.shape_cast %27 : vector<8xf32> to vector<8x1xf32>
    %29 = arith.truncf %26 : vector<8x8xf32> to vector<8x8xbf16>
    %cst_13 = arith.constant dense<0.000000e+00> : vector<8x8xf32>
    %30 = tpu.matmul %29, %20, %cst_13 {dimension_numbers = #tpu.dot_dimension_numbers<[1], [0], [0], [1], [0, 0, 1, 1], [], []>} : vector<8x8xbf16>, vector<8x8xbf16>, vector<8x8xf32> -> vector<8x8xf32>
    %31 = tpu.reciprocal %28 {approx = true} : vector<8x1xf32> -> vector<8x1xf32>
    %32 = vector.broadcast %31 : vector<8x1xf32> to vector<8x8xf32>
    %33 = arith.mulf %30, %32 : vector<8x8xf32>
    %34 = vector.extract_strided_slice %14 {offsets = [0, 8], sizes = [8, 8], strides = [1, 1]} : vector<8x32xbf16> to vector<8x8xbf16>
    %35 = vector.extract_strided_slice %16 {offsets = [0, 8], sizes = [8, 8], strides = [1, 1]} : vector<8x32xbf16> to vector<8x8xbf16>
    %36 = vector.extract_strided_slice %17 {offsets = [0, 8], sizes = [8, 8], strides = [1, 1]} : vector<8x32xbf16> to vector<8x8xbf16>
    %cst_14 = arith.constant dense<0.000000e+00> : vector<8x8xf32>
    %37 = tpu.matmul %34, %35, %cst_14 {dimension_numbers = #tpu.dot_dimension_numbers<[1], [1], [0], [0], [0, 0, 1, 0], [], []>} : vector<8x8xbf16>, vector<8x8xbf16>, vector<8x8xf32> -> vector<8x8xf32>
    %cst_15 = arith.constant dense<0xFF800000> : vector<8xf32>
    %38 = vector.multi_reduction <maximumf>, %37, %cst_15 [1] : vector<8x8xf32> to vector<8xf32>
    %39 = vector.shape_cast %38 : vector<8xf32> to vector<8x1xf32>
    %40 = vector.broadcast %39 : vector<8x1xf32> to vector<8x8xf32>
    %41 = arith.subf %37, %40 : vector<8x8xf32>
    %42 = math.exp %41 : vector<8x8xf32>
    %cst_16 = arith.constant dense<0.000000e+00> : vector<8xf32>
    %43 = vector.multi_reduction <add>, %42, %cst_16 [1] : vector<8x8xf32> to vector<8xf32>
    %44 = vector.shape_cast %43 : vector<8xf32> to vector<8x1xf32>
    %45 = arith.truncf %42 : vector<8x8xf32> to vector<8x8xbf16>
    %cst_17 = arith.constant dense<0.000000e+00> : vector<8x8xf32>
    %46 = tpu.matmul %45, %36, %cst_17 {dimension_numbers = #tpu.dot_dimension_numbers<[1], [0], [0], [1], [0, 0, 1, 1], [], []>} : vector<8x8xbf16>, vector<8x8xbf16>, vector<8x8xf32> -> vector<8x8xf32>
    %47 = tpu.reciprocal %44 {approx = true} : vector<8x1xf32> -> vector<8x1xf32>
    %48 = vector.broadcast %47 : vector<8x1xf32> to vector<8x8xf32>
    %49 = arith.mulf %46, %48 : vector<8x8xf32>
    %50 = vector.extract_strided_slice %14 {offsets = [0, 16], sizes = [8, 8], strides = [1, 1]} : vector<8x32xbf16> to vector<8x8xbf16>
    %51 = vector.extract_strided_slice %16 {offsets = [0, 16], sizes = [8, 8], strides = [1, 1]} : vector<8x32xbf16> to vector<8x8xbf16>
    %52 = vector.extract_strided_slice %17 {offsets = [0, 16], sizes = [8, 8], strides = [1, 1]} : vector<8x32xbf16> to vector<8x8xbf16>
    %cst_18 = arith.constant dense<0.000000e+00> : vector<8x8xf32>
    %53 = tpu.matmul %50, %51, %cst_18 {dimension_numbers = #tpu.dot_dimension_numbers<[1], [1], [0], [0], [0, 0, 1, 0], [], []>} : vector<8x8xbf16>, vector<8x8xbf16>, vector<8x8xf32> -> vector<8x8xf32>
    %cst_19 = arith.constant dense<0xFF800000> : vector<8xf32>
    %54 = vector.multi_reduction <maximumf>, %53, %cst_19 [1] : vector<8x8xf32> to vector<8xf32>
    %55 = vector.shape_cast %54 : vector<8xf32> to vector<8x1xf32>
    %56 = vector.broadcast %55 : vector<8x1xf32> to vector<8x8xf32>
    %57 = arith.subf %53, %56 : vector<8x8xf32>
    %58 = math.exp %57 : vector<8x8xf32>
    %cst_20 = arith.constant dense<0.000000e+00> : vector<8xf32>
    %59 = vector.multi_reduction <add>, %58, %cst_20 [1] : vector<8x8xf32> to vector<8xf32>
    %60 = vector.shape_cast %59 : vector<8xf32> to vector<8x1xf32>
    %61 = arith.truncf %58 : vector<8x8xf32> to vector<8x8xbf16>
    %cst_21 = arith.constant dense<0.000000e+00> : vector<8x8xf32>
    %62 = tpu.matmul %61, %52, %cst_21 {dimension_numbers = #tpu.dot_dimension_numbers<[1], [0], [0], [1], [0, 0, 1, 1], [], []>} : vector<8x8xbf16>, vector<8x8xbf16>, vector<8x8xf32> -> vector<8x8xf32>
    %63 = tpu.reciprocal %60 {approx = true} : vector<8x1xf32> -> vector<8x1xf32>
    %64 = vector.broadcast %63 : vector<8x1xf32> to vector<8x8xf32>
    %65 = arith.mulf %62, %64 : vector<8x8xf32>
    %66 = vector.extract_strided_slice %14 {offsets = [0, 24], sizes = [8, 8], strides = [1, 1]} : vector<8x32xbf16> to vector<8x8xbf16>
    %67 = vector.extract_strided_slice %16 {offsets = [0, 24], sizes = [8, 8], strides = [1, 1]} : vector<8x32xbf16> to vector<8x8xbf16>
    %68 = vector.extract_strided_slice %17 {offsets = [0, 24], sizes = [8, 8], strides = [1, 1]} : vector<8x32xbf16> to vector<8x8xbf16>
    %cst_22 = arith.constant dense<0.000000e+00> : vector<8x8xf32>
    %69 = tpu.matmul %66, %67, %cst_22 {dimension_numbers = #tpu.dot_dimension_numbers<[1], [1], [0], [0], [0, 0, 1, 0], [], []>} : vector<8x8xbf16>, vector<8x8xbf16>, vector<8x8xf32> -> vector<8x8xf32>
    %cst_23 = arith.constant dense<0xFF800000> : vector<8xf32>
    %70 = vector.multi_reduction <maximumf>, %69, %cst_23 [1] : vector<8x8xf32> to vector<8xf32>
    %71 = vector.shape_cast %70 : vector<8xf32> to vector<8x1xf32>
    %72 = vector.broadcast %71 : vector<8x1xf32> to vector<8x8xf32>
    %73 = arith.subf %69, %72 : vector<8x8xf32>
    %74 = math.exp %73 : vector<8x8xf32>
    %cst_24 = arith.constant dense<0.000000e+00> : vector<8xf32>
    %75 = vector.multi_reduction <add>, %74, %cst_24 [1] : vector<8x8xf32> to vector<8xf32>
    %76 = vector.shape_cast %75 : vector<8xf32> to vector<8x1xf32>
    %77 = arith.truncf %74 : vector<8x8xf32> to vector<8x8xbf16>
    %cst_25 = arith.constant dense<0.000000e+00> : vector<8x8xf32>
    %78 = tpu.matmul %77, %68, %cst_25 {dimension_numbers = #tpu.dot_dimension_numbers<[1], [0], [0], [1], [0, 0, 1, 1], [], []>} : vector<8x8xbf16>, vector<8x8xbf16>, vector<8x8xf32> -> vector<8x8xf32>
    %79 = tpu.reciprocal %76 {approx = true} : vector<8x1xf32> -> vector<8x1xf32>
    %80 = vector.broadcast %79 : vector<8x1xf32> to vector<8x8xf32>
    %81 = arith.mulf %78, %80 : vector<8x8xf32>
    %82 = tpu.concatenate %33, %49, %65, %81 in 1 : vector<8x8xf32>, vector<8x8xf32>, vector<8x8xf32>, vector<8x8xf32> -> vector<8x32xf32>
    %c0_26 = arith.constant 0 : index
    %c0_27 = arith.constant 0 : index
    %c0_28 = arith.constant 0 : index
    %83 = vector.load %arg5[%c0_26, %c0_27, %c0_28] : memref<2x8x32xf32, #tpu.memory_space<vmem>>, vector<1x8x32xf32>
    %84 = vector.shape_cast %83 : vector<1x8x32xf32> to vector<8x32xf32>
    %85 = vector.shape_cast %82 : vector<8x32xf32> to vector<1x8x32xf32>
    tpu.vector_store %arg5[%c0_26, %c0_27, %c0_28], %85 {strides = array<i32>} : memref<2x8x32xf32, #tpu.memory_space<vmem>>, vector<1x8x32xf32>,
    %86 = vector.extract_strided_slice %3 {offsets = [1, 0, 0], sizes = [1, 8, 32], strides = [1, 1, 1]} : vector<2x8x32xbf16> to vector<1x8x32xbf16>
    %87 = vector.shape_cast %86 : vector<1x8x32xbf16> to vector<8x32xbf16>
    %cst_29 = arith.constant dense<0.000000e+00> : vector<8x64xf32>
    %88 = tpu.matmul %87, %5, %cst_29 {dimension_numbers = #tpu.dot_dimension_numbers<[1], [0], [0], [1], [0, 0, 1, 1], [], []>} : vector<8x32xbf16>, vector<32x64xbf16>, vector<8x64xf32> -> vector<8x64xf32>
    %89 = vector.extract_strided_slice %4 {offsets = [1, 0, 0], sizes = [1, 8, 32], strides = [1, 1, 1]} : vector<2x8x32xbf16> to vector<1x8x32xbf16>
    %90 = vector.shape_cast %89 : vector<1x8x32xbf16> to vector<8x32xbf16>
    %cst_30 = arith.constant dense<0.000000e+00> : vector<8x32xf32>
    %91 = tpu.matmul %90, %6, %cst_30 {dimension_numbers = #tpu.dot_dimension_numbers<[1], [0], [0], [1], [0, 0, 1, 1], [], []>} : vector<8x32xbf16>, vector<32x32xbf16>, vector<8x32xf32> -> vector<8x32xf32>
    %92 = vector.extract_strided_slice %88 {offsets = [0, 0], sizes = [8, 32], strides = [1, 1]} : vector<8x64xf32> to vector<8x32xf32>
    %93 = arith.truncf %92 : vector<8x32xf32> to vector<8x32xbf16>
    %94 = vector.extract_strided_slice %88 {offsets = [0, 32], sizes = [8, 32], strides = [1, 1]} : vector<8x64xf32> to vector<8x32xf32>
    %95 = arith.truncf %94 : vector<8x32xf32> to vector<8x32xbf16>
    %96 = arith.truncf %91 : vector<8x32xf32> to vector<8x32xbf16>
    %97 = vector.extract_strided_slice %93 {offsets = [0, 0], sizes = [8, 8], strides = [1, 1]} : vector<8x32xbf16> to vector<8x8xbf16>
    %98 = vector.extract_strided_slice %95 {offsets = [0, 0], sizes = [8, 8], strides = [1, 1]} : vector<8x32xbf16> to vector<8x8xbf16>
    %99 = vector.extract_strided_slice %96 {offsets = [0, 0], sizes = [8, 8], strides = [1, 1]} : vector<8x32xbf16> to vector<8x8xbf16>
    %cst_31 = arith.constant dense<0.000000e+00> : vector<8x8xf32>
    %100 = tpu.matmul %97, %98, %cst_31 {dimension_numbers = #tpu.dot_dimension_numbers<[1], [1], [0], [0], [0, 0, 1, 0], [], []>} : vector<8x8xbf16>, vector<8x8xbf16>, vector<8x8xf32> -> vector<8x8xf32>
    %cst_32 = arith.constant dense<0xFF800000> : vector<8xf32>
    %101 = vector.multi_reduction <maximumf>, %100, %cst_32 [1] : vector<8x8xf32> to vector<8xf32>
    %102 = vector.shape_cast %101 : vector<8xf32> to vector<8x1xf32>
    %103 = vector.broadcast %102 : vector<8x1xf32> to vector<8x8xf32>
    %104 = arith.subf %100, %103 : vector<8x8xf32>
    %105 = math.exp %104 : vector<8x8xf32>
    %cst_33 = arith.constant dense<0.000000e+00> : vector<8xf32>
    %106 = vector.multi_reduction <add>, %105, %cst_33 [1] : vector<8x8xf32> to vector<8xf32>
    %107 = vector.shape_cast %106 : vector<8xf32> to vector<8x1xf32>
    %108 = arith.truncf %105 : vector<8x8xf32> to vector<8x8xbf16>
    %cst_34 = arith.constant dense<0.000000e+00> : vector<8x8xf32>
    %109 = tpu.matmul %108, %99, %cst_34 {dimension_numbers = #tpu.dot_dimension_numbers<[1], [0], [0], [1], [0, 0, 1, 1], [], []>} : vector<8x8xbf16>, vector<8x8xbf16>, vector<8x8xf32> -> vector<8x8xf32>
    %110 = tpu.reciprocal %107 {approx = true} : vector<8x1xf32> -> vector<8x1xf32>
    %111 = vector.broadcast %110 : vector<8x1xf32> to vector<8x8xf32>
    %112 = arith.mulf %109, %111 : vector<8x8xf32>
    %113 = vector.extract_strided_slice %93 {offsets = [0, 8], sizes = [8, 8], strides = [1, 1]} : vector<8x32xbf16> to vector<8x8xbf16>
    %114 = vector.extract_strided_slice %95 {offsets = [0, 8], sizes = [8, 8], strides = [1, 1]} : vector<8x32xbf16> to vector<8x8xbf16>
    %115 = vector.extract_strided_slice %96 {offsets = [0, 8], sizes = [8, 8], strides = [1, 1]} : vector<8x32xbf16> to vector<8x8xbf16>
    %cst_35 = arith.constant dense<0.000000e+00> : vector<8x8xf32>
    %116 = tpu.matmul %113, %114, %cst_35 {dimension_numbers = #tpu.dot_dimension_numbers<[1], [1], [0], [0], [0, 0, 1, 0], [], []>} : vector<8x8xbf16>, vector<8x8xbf16>, vector<8x8xf32> -> vector<8x8xf32>
    %cst_36 = arith.constant dense<0xFF800000> : vector<8xf32>
    %117 = vector.multi_reduction <maximumf>, %116, %cst_36 [1] : vector<8x8xf32> to vector<8xf32>
    %118 = vector.shape_cast %117 : vector<8xf32> to vector<8x1xf32>
    %119 = vector.broadcast %118 : vector<8x1xf32> to vector<8x8xf32>
    %120 = arith.subf %116, %119 : vector<8x8xf32>
    %121 = math.exp %120 : vector<8x8xf32>
    %cst_37 = arith.constant dense<0.000000e+00> : vector<8xf32>
    %122 = vector.multi_reduction <add>, %121, %cst_37 [1] : vector<8x8xf32> to vector<8xf32>
    %123 = vector.shape_cast %122 : vector<8xf32> to vector<8x1xf32>
    %124 = arith.truncf %121 : vector<8x8xf32> to vector<8x8xbf16>
    %cst_38 = arith.constant dense<0.000000e+00> : vector<8x8xf32>
    %125 = tpu.matmul %124, %115, %cst_38 {dimension_numbers = #tpu.dot_dimension_numbers<[1], [0], [0], [1], [0, 0, 1, 1], [], []>} : vector<8x8xbf16>, vector<8x8xbf16>, vector<8x8xf32> -> vector<8x8xf32>
    %126 = tpu.reciprocal %123 {approx = true} : vector<8x1xf32> -> vector<8x1xf32>
    %127 = vector.broadcast %126 : vector<8x1xf32> to vector<8x8xf32>
    %128 = arith.mulf %125, %127 : vector<8x8xf32>
    %129 = vector.extract_strided_slice %93 {offsets = [0, 16], sizes = [8, 8], strides = [1, 1]} : vector<8x32xbf16> to vector<8x8xbf16>
    %130 = vector.extract_strided_slice %95 {offsets = [0, 16], sizes = [8, 8], strides = [1, 1]} : vector<8x32xbf16> to vector<8x8xbf16>
    %131 = vector.extract_strided_slice %96 {offsets = [0, 16], sizes = [8, 8], strides = [1, 1]} : vector<8x32xbf16> to vector<8x8xbf16>
    %cst_39 = arith.constant dense<0.000000e+00> : vector<8x8xf32>
    %132 = tpu.matmul %129, %130, %cst_39 {dimension_numbers = #tpu.dot_dimension_numbers<[1], [1], [0], [0], [0, 0, 1, 0], [], []>} : vector<8x8xbf16>, vector<8x8xbf16>, vector<8x8xf32> -> vector<8x8xf32>
    %cst_40 = arith.constant dense<0xFF800000> : vector<8xf32>
    %133 = vector.multi_reduction <maximumf>, %132, %cst_40 [1] : vector<8x8xf32> to vector<8xf32>
    %134 = vector.shape_cast %133 : vector<8xf32> to vector<8x1xf32>
    %135 = vector.broadcast %134 : vector<8x1xf32> to vector<8x8xf32>
    %136 = arith.subf %132, %135 : vector<8x8xf32>
    %137 = math.exp %136 : vector<8x8xf32>
    %cst_41 = arith.constant dense<0.000000e+00> : vector<8xf32>
    %138 = vector.multi_reduction <add>, %137, %cst_41 [1] : vector<8x8xf32> to vector<8xf32>
    %139 = vector.shape_cast %138 : vector<8xf32> to vector<8x1xf32>
    %140 = arith.truncf %137 : vector<8x8xf32> to vector<8x8xbf16>
    %cst_42 = arith.constant dense<0.000000e+00> : vector<8x8xf32>
    %141 = tpu.matmul %140, %131, %cst_42 {dimension_numbers = #tpu.dot_dimension_numbers<[1], [0], [0], [1], [0, 0, 1, 1], [], []>} : vector<8x8xbf16>, vector<8x8xbf16>, vector<8x8xf32> -> vector<8x8xf32>
    %142 = tpu.reciprocal %139 {approx = true} : vector<8x1xf32> -> vector<8x1xf32>
    %143 = vector.broadcast %142 : vector<8x1xf32> to vector<8x8xf32>
    %144 = arith.mulf %141, %143 : vector<8x8xf32>
    %145 = vector.extract_strided_slice %93 {offsets = [0, 24], sizes = [8, 8], strides = [1, 1]} : vector<8x32xbf16> to vector<8x8xbf16>
    %146 = vector.extract_strided_slice %95 {offsets = [0, 24], sizes = [8, 8], strides = [1, 1]} : vector<8x32xbf16> to vector<8x8xbf16>
    %147 = vector.extract_strided_slice %96 {offsets = [0, 24], sizes = [8, 8], strides = [1, 1]} : vector<8x32xbf16> to vector<8x8xbf16>
    %cst_43 = arith.constant dense<0.000000e+00> : vector<8x8xf32>
    %148 = tpu.matmul %145, %146, %cst_43 {dimension_numbers = #tpu.dot_dimension_numbers<[1], [1], [0], [0], [0, 0, 1, 0], [], []>} : vector<8x8xbf16>, vector<8x8xbf16>, vector<8x8xf32> -> vector<8x8xf32>
    %cst_44 = arith.constant dense<0xFF800000> : vector<8xf32>
    %149 = vector.multi_reduction <maximumf>, %148, %cst_44 [1] : vector<8x8xf32> to vector<8xf32>
    %150 = vector.shape_cast %149 : vector<8xf32> to vector<8x1xf32>
    %151 = vector.broadcast %150 : vector<8x1xf32> to vector<8x8xf32>
    %152 = arith.subf %148, %151 : vector<8x8xf32>
    %153 = math.exp %152 : vector<8x8xf32>
    %cst_45 = arith.constant dense<0.000000e+00> : vector<8xf32>
    %154 = vector.multi_reduction <add>, %153, %cst_45 [1] : vector<8x8xf32> to vector<8xf32>
    %155 = vector.shape_cast %154 : vector<8xf32> to vector<8x1xf32>
    %156 = arith.truncf %153 : vector<8x8xf32> to vector<8x8xbf16>
    %cst_46 = arith.constant dense<0.000000e+00> : vector<8x8xf32>
    %157 = tpu.matmul %156, %147, %cst_46 {dimension_numbers = #tpu.dot_dimension_numbers<[1], [0], [0], [1], [0, 0, 1, 1], [], []>} : vector<8x8xbf16>, vector<8x8xbf16>, vector<8x8xf32> -> vector<8x8xf32>
    %158 = tpu.reciprocal %155 {approx = true} : vector<8x1xf32> -> vector<8x1xf32>
    %159 = vector.broadcast %158 : vector<8x1xf32> to vector<8x8xf32>
    %160 = arith.mulf %157, %159 : vector<8x8xf32>
    %161 = tpu.concatenate %112, %128, %144, %160 in 1 : vector<8x8xf32>, vector<8x8xf32>, vector<8x8xf32>, vector<8x8xf32> -> vector<8x32xf32>
    %c1 = arith.constant 1 : index
    %c0_47 = arith.constant 0 : index
    %c0_48 = arith.constant 0 : index
    %162 = vector.load %arg5[%c1, %c0_47, %c0_48] : memref<2x8x32xf32, #tpu.memory_space<vmem>>, vector<1x8x32xf32>
    %163 = vector.shape_cast %162 : vector<1x8x32xf32> to vector<8x32xf32>
    %164 = vector.shape_cast %161 : vector<8x32xf32> to vector<1x8x32xf32>
    tpu.vector_store %arg5[%c1, %c0_47, %c0_48], %164 {strides = array<i32>} : memref<2x8x32xf32, #tpu.memory_space<vmem>>, vector<1x8x32xf32>,
    return
  }
  func.func @transform_0(%arg0: i32) -> (i32, i32, i32) {
    %c0_i32 = arith.constant 0 : i32
    %c0_i32_0 = arith.constant 0 : i32
    %c0_i32_1 = arith.constant 0 : i32
    return %arg0, %c0_i32, %c0_i32_0 : i32, i32, i32
  }
  func.func @transform_1(%arg0: i32) -> (i32, i32, i32) {
    %c0_i32 = arith.constant 0 : i32
    %c0_i32_0 = arith.constant 0 : i32
    %c0_i32_1 = arith.constant 0 : i32
    return %arg0, %c0_i32, %c0_i32_0 : i32, i32, i32
  }
  func.func @transform_2(%arg0: i32) -> (i32, i32) {
    %c0_i32 = arith.constant 0 : i32
    %c0_i32_0 = arith.constant 0 : i32
    %c0_i32_1 = arith.constant 0 : i32
    return %c0_i32, %c0_i32_0 : i32, i32
  }
  func.func @transform_3(%arg0: i32) -> (i32, i32) {
    %c0_i32 = arith.constant 0 : i32
    %c0_i32_0 = arith.constant 0 : i32
    %c0_i32_1 = arith.constant 0 : i32
    return %c0_i32, %c0_i32_0 : i32, i32
  }
  func.func @transform_4(%arg0: i32) -> (i32, i32, i32) {
    %c0_i32 = arith.constant 0 : i32
    %c0_i32_0 = arith.constant 0 : i32
    %c0_i32_1 = arith.constant 0 : i32
    return %arg0, %c0_i32, %c0_i32_0 : i32, i32, i32
  }
}

</mosaic_0001>

<llo_original>
// kernel: tpu_custom_call.1
$region0: #{tpu_custom_call.1}
  #allocation0 [shape = 'u32[]', space=smem, size = 0x4, offset = 0x4, fixed_abs, tag = 'smem constant byte address 0x4 - core index']
  #allocation1 [shape = 'u32[144,128]{1,0:T(1,128)}', space=vmem, size = 0x12000, scoped, tag = 'internal scratch']
  %s0 = inlined_call_operand.hbm [shape: f32[2,8,32], index: 0, kind: input, shape index: {}]
  %s1 = inlined_call_operand.hbm [shape: f32[2,8,32], index: 1, kind: input, shape index: {}]
  %s2 = inlined_call_operand.hbm [shape: bf16[32,64], index: 2, kind: input, shape index: {}]
  %s3 = inlined_call_operand.hbm [shape: bf16[32,32], index: 3, kind: input, shape index: {}]
  %s4 = inlined_call_operand.hbm [shape: f32[2,8,32], index: 4, kind: output, shape index: {}]
  %s5 = sld [smem:[#allocation0]]
  $region42: #{tpu_custom_call.1} parent=0
    _
  %s7 = ssub.s32 1, %s5
  %s8 = scalar_select 0, %s7, %s5
  $region1: #{tpu_custom_call.1} parent=0
    #allocation2 [shape = 'u8[8192]{0}', space=vmem, size = 0x2000, scoped, tag = 'input window, operand 0, single buffered']
    #allocation3 [shape = 's32[1]{0}', space=sflag, size = 0x4, scoped, tag = 'scoped memory for tpu_custom_call.1']
    #allocation4 [shape = 's32[1]{0}', space=sflag, size = 0x4, scoped, tag = 'scoped memory for tpu_custom_call.1']
    #allocation5 [shape = 'u8[8192]{0}', space=vmem, size = 0x2000, scoped, tag = 'input window, operand 1, single buffered']
    #allocation6 [shape = 's32[1]{0}', space=sflag, size = 0x4, scoped, tag = 'scoped memory for tpu_custom_call.1']
    #allocation7 [shape = 'u8[8192]{0}', space=vmem, size = 0x2000, scoped, tag = 'input window, operand 2, single buffered']
    #allocation8 [shape = 'u8[8192]{0}', space=vmem, size = 0x2000, scoped, tag = 'input window, operand 3, single buffered']
    #allocation9 [shape = 's32[1]{0}', space=sflag, size = 0x4, scoped, tag = 'scoped memory for tpu_custom_call.1']
    #allocation10 [shape = 'u8[8192]{0}', space=vmem, size = 0x2000, scoped, tag = 'output window, operand 0, single buffered']
    %9 = vsyncpa [#allocation3], 0
    %10 = vsyncpa [#allocation6], 0
    %11 = vsyncpa [#allocation9], 0
    %12 = vsyncpa [#allocation4], 0
    // Predicated region
    $region2: #{tpu_custom_call.1} parent=1 // pred_check
      _
    $region3: #{tpu_custom_call.1} parent=1 // pred_check_branch
      %14 = sbr.rel (0) target = $region5
    $region4: #{tpu_custom_call.1} parent=1 // pred_region
      %s16 = ssub.s32 256, 256
      %17 = vsyncadd [#allocation3], %s16
      %s18 = sshll.u32 [#allocation2], 4
      %s19 = int_to_ptr.vmem [resolvable:$true] %s18
      %24 = dma.hbm_to_vmem [thread:$0]  %s0, 256, %s19, [#allocation3], 128, 128, 8
    $region5: #{tpu_custom_call.1} parent=1 // pred_fallthru
      _
    // Predicated region
    $region6: #{tpu_custom_call.1} parent=1 // pred_check
      _
    $region7: #{tpu_custom_call.1} parent=1 // pred_check_branch
      %26 = sbr.rel (0) target = $region9
    $region8: #{tpu_custom_call.1} parent=1 // pred_region
      %s28 = ssub.s32 256, 256
      %29 = vsyncadd [#allocation6], %s28
      %s30 = sshll.u32 [#allocation5], 4
      %s31 = int_to_ptr.vmem [resolvable:$true] %s30
      %36 = dma.hbm_to_vmem [thread:$0]  %s1, 256, %s31, [#allocation6], 128, 128, 8
    $region9: #{tpu_custom_call.1} parent=1 // pred_fallthru
      _
    // Predicated region
    $region10: #{tpu_custom_call.1} parent=1 // pred_check
      _
    $region11: #{tpu_custom_call.1} parent=1 // pred_check_branch
      %38 = sbr.rel (0) target = $region13
    $region12: #{tpu_custom_call.1} parent=1 // pred_region
      %s40 = ssub.s32 256, 256
      %41 = vsyncadd [#allocation6], %s40
      %s42 = sshll.u32 [#allocation7], 4
      %s43 = int_to_ptr.vmem [resolvable:$true] %s42
      %48 = dma.hbm_to_vmem [thread:$0]  %s2, 256, %s43, [#allocation6], 64, 64, 4
    $region13: #{tpu_custom_call.1} parent=1 // pred_fallthru
      _
    // Predicated region
    $region14: #{tpu_custom_call.1} parent=1 // pred_check
      _
    $region15: #{tpu_custom_call.1} parent=1 // pred_check_branch
      %50 = sbr.rel (0) target = $region17
    $region16: #{tpu_custom_call.1} parent=1 // pred_region
      %s52 = ssub.s32 256, 256
      %53 = vsyncadd [#allocation9], %s52
      %s54 = sshll.u32 [#allocation8], 4
      %s55 = int_to_ptr.vmem [resolvable:$true] %s54
      %60 = dma.hbm_to_vmem [thread:$0]  %s3, 256, %s55, [#allocation9], 64, 64, 4
    $region17: #{tpu_custom_call.1} parent=1 // pred_fallthru
      _
    // Predicated region
    $region18: #{tpu_custom_call.1} parent=1 // pred_check
      _
    $region19: #{tpu_custom_call.1} parent=1 // pred_check_branch
      %62 = sbr.rel (0) target = $region21
    $region20: #{tpu_custom_call.1} parent=1 // pred_region
      %63 = dma.done [#allocation3], 256
    $region21: #{tpu_custom_call.1} parent=1 // pred_fallthru
      _
    // Predicated region
    $region22: #{tpu_custom_call.1} parent=1 // pred_check
      _
    $region23: #{tpu_custom_call.1} parent=1 // pred_check_branch
      %65 = sbr.rel (0) target = $region25
    $region24: #{tpu_custom_call.1} parent=1 // pred_region
      %66 = dma.done [#allocation6], 256
    $region25: #{tpu_custom_call.1} parent=1 // pred_fallthru
      _
    // Predicated region
    $region26: #{tpu_custom_call.1} parent=1 // pred_check
      _
    $region27: #{tpu_custom_call.1} parent=1 // pred_check_branch
      %68 = sbr.rel (0) target = $region29
    $region28: #{tpu_custom_call.1} parent=1 // pred_region
      %69 = dma.done [#allocation6], 256
    $region29: #{tpu_custom_call.1} parent=1 // pred_fallthru
      _
    // Predicated region
    $region30: #{tpu_custom_call.1} parent=1 // pred_check
      _
    $region31: #{tpu_custom_call.1} parent=1 // pred_check_branch
      %71 = sbr.rel (0) target = $region33
    $region32: #{tpu_custom_call.1} parent=1 // pred_region
      %72 = dma.done [#allocation9], 256
    $region33: #{tpu_custom_call.1} parent=1 // pred_fallthru
      _
    %v74 = vld [vmem:[#allocation2] sm:$0xff]
    %v75 = vld [vmem:[#allocation2 + $0x8] sm:$0xff]
    %v76 = vld [vmem:[#allocation5] sm:$0xff]
    %v77 = vld [vmem:[#allocation5 + $0x8] sm:$0xff]
    %v78 = vadd.f32 %v74, %v76
    %v79 = vadd.f32 %v75, %v77
    %v80 = vpack.c.bf16 %v78, %v78
    %v81 = vpack.c.bf16 %v79, %v79
    %v82 = vpack.c.bf16 %v74, %v74
    %v83 = vpack.c.bf16 %v75, %v75
    %v84 = vld [vmem:[#allocation7] sm:$0xf]
    %v85 = vld [vmem:[#allocation7 + $0x4] sm:$0xf]
    %v86 = vld [vmem:[#allocation7 + $0x8] sm:$0xf]
    %v87 = vld [vmem:[#allocation7 + $0xc] sm:$0xf]
    %v88 = vld [vmem:[#allocation8] sm:$0xf]
    %v89 = vld [vmem:[#allocation8 + $0x4] sm:$0xf]
    %v90 = vld [vmem:[#allocation8 + $0x8] sm:$0xf]
    %v91 = vld [vmem:[#allocation8 + $0xc] sm:$0xf]
    %v96 = vunpack.c.l.b16 %v84
    %v97 = vunpack.c.l.b16 %v85
    %v98 = vunpack.c.l.b16 %v86
    %v99 = vunpack.c.l.b16 %v87
    %v100 = vpack.c.b16 %v97, %v96
    %v101 = vpack.c.b16 %v99, %v98
    %vm104 = vcmask 261120
    %v106 = vsel %vm104, %v80, 0
    %108 = vmatprep.subr.bf16.mxu0 0
    %109 = vmatpush1.bf16.msra.mxu0 %v100
    %110 = vmatprep.subr.bf16.mxu0 0
    %111 = vmatpush1.bf16.msra.mxu0 %v101
    %112 = vmatprep.subr.bf16.mxu0 0
    %113 = vmatpush1.bf16.msra.mxu0 0
    %114 = vmatprep.subr.bf16.mxu0 0
    %115 = vmatpush1.bf16.msra.mxu0 0
    %116 = vmatprep.subr.bf16.mxu0 0
    %117 = vmatpush1.bf16.msra.mxu0 0
    %118 = vmatprep.subr.bf16.mxu0 0
    %119 = vmatpush1.bf16.msra.mxu0 0
    %120 = vmatprep.subr.bf16.mxu0 0
    %121 = vmatpush1.bf16.msra.mxu0 0
    %122 = vmatprep.subr.bf16.mxu0 0
    %123 = vmatpush1.bf16.msra.mxu0 0
    %124 = vmatprep.subr.bf16.mxu0 0
    %125 = vmatpush1.bf16.msra.mxu0 0
    %126 = vmatprep.subr.bf16.mxu0 0
    %127 = vmatpush1.bf16.msra.mxu0 0
    %128 = vmatprep.subr.bf16.mxu0 0
    %129 = vmatpush1.bf16.msra.mxu0 0
    %130 = vmatprep.subr.bf16.mxu0 0
    %131 = vmatpush1.bf16.msra.mxu0 0
    %132 = vmatprep.subr.bf16.mxu0 0
    %133 = vmatpush1.bf16.msra.mxu0 0
    %134 = vmatprep.subr.bf16.mxu0 0
    %135 = vmatpush1.bf16.msra.mxu0 0
    %136 = vmatprep.subr.bf16.mxu0 0
    %137 = vmatpush1.bf16.msra.mxu0 0
    %138 = vmatprep.subr.bf16.mxu0 0
    %139 = vmatpush1.bf16.msra.mxu0 0
    %140 = vmatprep.mubr.bf16.mxu0 0
    %141 = vmatmul.mubr.bf16.gmra.mrb[0].mxu0 %v106
    %v142 = vpop.f32.mrb[0].mxu0
    %v143 = vadd.f32 0.0, %v142
    %v144 = vpop.f32.mrb[0].mxu0
    %v145 = vpop.f32.mrb[0].mxu0
    %v146 = vpop.f32.mrb[0].mxu0
    %147 = vdwg.mxu0
    %v152 = vunpack.c.l.b16 %v88
    %v153 = vunpack.c.l.b16 %v89
    %v154 = vunpack.c.l.b16 %v90
    %v155 = vunpack.c.l.b16 %v91
    %v156 = vpack.c.b16 %v153, %v152
    %v157 = vpack.c.b16 %v155, %v154
    %v161 = vsel %vm104, %v82, 0
    %163 = vmatprep.subr.bf16.mxu0 0
    %164 = vmatpush1.bf16.msra.mxu0 %v156
    %165 = vmatprep.subr.bf16.mxu0 0
    %166 = vmatpush1.bf16.msra.mxu0 %v157
    %167 = vmatprep.subr.bf16.mxu0 0
    %168 = vmatpush1.bf16.msra.mxu0 0
    %169 = vmatprep.subr.bf16.mxu0 0
    %170 = vmatpush1.bf16.msra.mxu0 0
    %171 = vmatprep.subr.bf16.mxu0 0
    %172 = vmatpush1.bf16.msra.mxu0 0
    %173 = vmatprep.subr.bf16.mxu0 0
    %174 = vmatpush1.bf16.msra.mxu0 0
    %175 = vmatprep.subr.bf16.mxu0 0
    %176 = vmatpush1.bf16.msra.mxu0 0
    %177 = vmatprep.subr.bf16.mxu0 0
    %178 = vmatpush1.bf16.msra.mxu0 0
    %179 = vmatprep.subr.bf16.mxu0 0
    %180 = vmatpush1.bf16.msra.mxu0 0
    %181 = vmatprep.subr.bf16.mxu0 0
    %182 = vmatpush1.bf16.msra.mxu0 0
    %183 = vmatprep.subr.bf16.mxu0 0
    %184 = vmatpush1.bf16.msra.mxu0 0
    %185 = vmatprep.subr.bf16.mxu0 0
    %186 = vmatpush1.bf16.msra.mxu0 0
    %187 = vmatprep.subr.bf16.mxu0 0
    %188 = vmatpush1.bf16.msra.mxu0 0
    %189 = vmatprep.subr.bf16.mxu0 0
    %190 = vmatpush1.bf16.msra.mxu0 0
    %191 = vmatprep.subr.bf16.mxu0 0
    %192 = vmatpush1.bf16.msra.mxu0 0
    %193 = vmatprep.subr.bf16.mxu0 0
    %194 = vmatpush1.bf16.msra.mxu0 0
    %195 = vmatprep.mubr.bf16.mxu0 0
    %196 = vmatmul.mubr.bf16.gmra.mrb[0].mxu0 %v161
    %v197 = vpop.f32.mrb[0].mxu0
    %v198 = vadd.f32 0.0, %v197
    %v199 = vpop.f32.mrb[0].mxu0
    %v200 = vpop.f32.mrb[0].mxu0
    %v201 = vpop.f32.mrb[0].mxu0
    %202 = vdwg.mxu0
    %v203 = vpack.c.bf16 %v143, %v143
    %v204 = vpack.c.bf16 %v198, %v198
    %206 = vrot.lane.b32.xlu0 %v203, 96
    %v207 = vpop.permute.xlu0 %206
    %vm208 = vcmask 64512
    %v210 = vsel %vm208, %v203, 0
    %v213 = vsel %vm208, %v207, 0
    %215 = vmatprep.subr.bf16.mxu0 0
    %216 = vmatpush1.bf16.xpose.msra.mxu0 %v213
    %217 = vmatprep.subr.bf16.mxu0 0
    %218 = vmatpush1.bf16.xpose.msra.mxu0 0
    %219 = vmatprep.subr.bf16.mxu0 0
    %220 = vmatpush1.bf16.xpose.msra.mxu0 0
    %221 = vmatprep.subr.bf16.mxu0 0
    %222 = vmatpush1.bf16.xpose.msra.mxu0 0
    %223 = vmatprep.subr.bf16.mxu0 0
    %224 = vmatpush1.bf16.xpose.msra.mxu0 0
    %225 = vmatprep.subr.bf16.mxu0 0
    %226 = vmatpush1.bf16.xpose.msra.mxu0 0
    %227 = vmatprep.subr.bf16.mxu0 0
    %228 = vmatpush1.bf16.xpose.msra.mxu0 0
    %229 = vmatprep.subr.bf16.mxu0 0
    %230 = vmatpush1.bf16.xpose.msra.mxu0 0
    %231 = vmatprep.subr.bf16.mxu0 0
    %232 = vmatpush1.bf16.xpose.msra.mxu0 0
    %233 = vmatprep.subr.bf16.mxu0 0
    %234 = vmatpush1.bf16.xpose.msra.mxu0 0
    %235 = vmatprep.subr.bf16.mxu0 0
    %236 = vmatpush1.bf16.xpose.msra.mxu0 0
    %237 = vmatprep.subr.bf16.mxu0 0
    %238 = vmatpush1.bf16.xpose.msra.mxu0 0
    %239 = vmatprep.subr.bf16.mxu0 0
    %240 = vmatpush1.bf16.xpose.msra.mxu0 0
    %241 = vmatprep.subr.bf16.mxu0 0
    %242 = vmatpush1.bf16.xpose.msra.mxu0 0
    %243 = vmatprep.subr.bf16.mxu0 0
    %244 = vmatpush1.bf16.xpose.msra.mxu0 0
    %245 = vmatprep.subr.bf16.mxu0 0
    %246 = vmatpush1.bf16.xpose.msra.mxu0 0
    %247 = vmatprep.mubr.bf16.mxu0 0
    %248 = vmatmul.mubr.bf16.gmra.mrb[0].mxu0 %v210
    %v249 = vpop.f32.mrb[0].mxu0
    %v250 = vadd.f32 0.0, %v249
    %v251 = vpop.f32.mrb[0].mxu0
    %v252 = vpop.f32.mrb[0].mxu0
    %v253 = vpop.f32.mrb[0].mxu0
    %254 = vdwg.mxu0
    %v255 = vsel %vm208, %v250, -inf
    %256 = vmax.xlane.f32.xlu0 %v255
    %v257 = vpop.xlane.xlu0 %256
    %v258 = vsub.f32 %v250, %v257
    %v259 = vmul.f32 %v258, 1.442695
    %v260 = vpow.pop %v259
    %v261 = vsel %vm208, %v260, 0.0
    %262 = vadd.xlane.f32.xlu0 %v261
    %v263 = vpop.xlane.xlu0 %262
    %v264 = vpack.c.bf16 %v260, %v260
    %v266 = vsel %vm208, %v264, 0
    %vm268 = vcmask 1043456
    %v270 = vsel %vm268, %v204, 0
    %272 = vmatprep.subr.bf16.mxu0 0
    %273 = vmatpush1.bf16.msra.mxu0 %v270
    %274 = vmatprep.subr.bf16.mxu0 0
    %275 = vmatpush1.bf16.msra.mxu0 0
    %276 = vmatprep.subr.bf16.mxu0 0
    %277 = vmatpush1.bf16.msra.mxu0 0
    %278 = vmatprep.subr.bf16.mxu0 0
    %279 = vmatpush1.bf16.msra.mxu0 0
    %280 = vmatprep.subr.bf16.mxu0 0
    %281 = vmatpush1.bf16.msra.mxu0 0
    %282 = vmatprep.subr.bf16.mxu0 0
    %283 = vmatpush1.bf16.msra.mxu0 0
    %284 = vmatprep.subr.bf16.mxu0 0
    %285 = vmatpush1.bf16.msra.mxu0 0
    %286 = vmatprep.subr.bf16.mxu0 0
    %287 = vmatpush1.bf16.msra.mxu0 0
    %288 = vmatprep.subr.bf16.mxu0 0
    %289 = vmatpush1.bf16.msra.mxu0 0
    %290 = vmatprep.subr.bf16.mxu0 0
    %291 = vmatpush1.bf16.msra.mxu0 0
    %292 = vmatprep.subr.bf16.mxu0 0
    %293 = vmatpush1.bf16.msra.mxu0 0
    %294 = vmatprep.subr.bf16.mxu0 0
    %295 = vmatpush1.bf16.msra.mxu0 0
    %296 = vmatprep.subr.bf16.mxu0 0
    %297 = vmatpush1.bf16.msra.mxu0 0
    %298 = vmatprep.subr.bf16.mxu0 0
    %299 = vmatpush1.bf16.msra.mxu0 0
    %300 = vmatprep.subr.bf16.mxu0 0
    %301 = vmatpush1.bf16.msra.mxu0 0
    %302 = vmatprep.subr.bf16.mxu0 0
    %303 = vmatpush1.bf16.msra.mxu0 0
    %304 = vmatprep.mubr.bf16.mxu0 0
    %305 = vmatmul.mubr.bf16.gmra.mrb[0].mxu0 %v266
    %v306 = vpop.f32.mrb[0].mxu0
    %v307 = vadd.f32 0.0, %v306
    %v308 = vpop.f32.mrb[0].mxu0
    %v309 = vpop.f32.mrb[0].mxu0
    %v310 = vpop.f32.mrb[0].mxu0
    %311 = vdwg.mxu0
    %v312 = vrcp.pop %v263
    %v313 = vmul.f32 %v307, %v312
    %314 = vrot.lane.b32.xlu0 %v203, 120
    %v315 = vpop.permute.xlu0 %314
    %316 = vrot.lane.b32.xlu0 %v203, 88
    %v317 = vpop.permute.xlu0 %316
    %v319 = vsel %vm208, %v315, 0
    %v322 = vsel %vm208, %v317, 0
    %324 = vmatprep.subr.bf16.mxu0 0
    %325 = vmatpush1.bf16.xpose.msra.mxu0 %v322
    %326 = vmatprep.subr.bf16.mxu0 0
    %327 = vmatpush1.bf16.xpose.msra.mxu0 0
    %328 = vmatprep.subr.bf16.mxu0 0
    %329 = vmatpush1.bf16.xpose.msra.mxu0 0
    %330 = vmatprep.subr.bf16.mxu0 0
    %331 = vmatpush1.bf16.xpose.msra.mxu0 0
    %332 = vmatprep.subr.bf16.mxu0 0
    %333 = vmatpush1.bf16.xpose.msra.mxu0 0
    %334 = vmatprep.subr.bf16.mxu0 0
    %335 = vmatpush1.bf16.xpose.msra.mxu0 0
    %336 = vmatprep.subr.bf16.mxu0 0
    %337 = vmatpush1.bf16.xpose.msra.mxu0 0
    %338 = vmatprep.subr.bf16.mxu0 0
    %339 = vmatpush1.bf16.xpose.msra.mxu0 0
    %340 = vmatprep.subr.bf16.mxu0 0
    %341 = vmatpush1.bf16.xpose.msra.mxu0 0
    %342 = vmatprep.subr.bf16.mxu0 0
    %343 = vmatpush1.bf16.xpose.msra.mxu0 0
    %344 = vmatprep.subr.bf16.mxu0 0
    %345 = vmatpush1.bf16.xpose.msra.mxu0 0
    %346 = vmatprep.subr.bf16.mxu0 0
    %347 = vmatpush1.bf16.xpose.msra.mxu0 0
    %348 = vmatprep.subr.bf16.mxu0 0
    %349 = vmatpush1.bf16.xpose.msra.mxu0 0
    %350 = vmatprep.subr.bf16.mxu0 0
    %351 = vmatpush1.bf16.xpose.msra.mxu0 0
    %352 = vmatprep.subr.bf16.mxu0 0
    %353 = vmatpush1.bf16.xpose.msra.mxu0 0
    %354 = vmatprep.subr.bf16.mxu0 0
    %355 = vmatpush1.bf16.xpose.msra.mxu0 0
    %356 = vmatprep.mubr.bf16.mxu0 0
    %357 = vmatmul.mubr.bf16.gmra.mrb[0].mxu0 %v319
    %v358 = vpop.f32.mrb[0].mxu0
    %v359 = vadd.f32 0.0, %v358
    %v360 = vpop.f32.mrb[0].mxu0
    %v361 = vpop.f32.mrb[0].mxu0
    %v362 = vpop.f32.mrb[0].mxu0
    %363 = vdwg.mxu0
    %v364 = vsel %vm208, %v359, -inf
    %365 = vmax.xlane.f32.xlu0 %v364
    %v366 = vpop.xlane.xlu0 %365
    %v367 = vsub.f32 %v359, %v366
    %v368 = vmul.f32 %v367, 1.442695
    %v369 = vpow.pop %v368
    %v370 = vsel %vm208, %v369, 0.0
    %371 = vadd.xlane.f32.xlu0 %v370
    %v372 = vpop.xlane.xlu0 %371
    %v373 = vpack.c.bf16 %v369, %v369
    %375 = vrot.lane.b32.xlu0 %v204, 120
    %v376 = vpop.permute.xlu0 %375
    %v378 = vsel %vm208, %v373, 0
    %v381 = vsel %vm268, %v376, 0
    %383 = vmatprep.subr.bf16.mxu0 0
    %384 = vmatpush1.bf16.msra.mxu0 %v381
    %385 = vmatprep.subr.bf16.mxu0 0
    %386 = vmatpush1.bf16.msra.mxu0 0
    %387 = vmatprep.subr.bf16.mxu0 0
    %388 = vmatpush1.bf16.msra.mxu0 0
    %389 = vmatprep.subr.bf16.mxu0 0
    %390 = vmatpush1.bf16.msra.mxu0 0
    %391 = vmatprep.subr.bf16.mxu0 0
    %392 = vmatpush1.bf16.msra.mxu0 0
    %393 = vmatprep.subr.bf16.mxu0 0
    %394 = vmatpush1.bf16.msra.mxu0 0
    %395 = vmatprep.subr.bf16.mxu0 0
    %396 = vmatpush1.bf16.msra.mxu0 0
    %397 = vmatprep.subr.bf16.mxu0 0
    %398 = vmatpush1.bf16.msra.mxu0 0
    %399 = vmatprep.subr.bf16.mxu0 0
    %400 = vmatpush1.bf16.msra.mxu0 0
    %401 = vmatprep.subr.bf16.mxu0 0
    %402 = vmatpush1.bf16.msra.mxu0 0
    %403 = vmatprep.subr.bf16.mxu0 0
    %404 = vmatpush1.bf16.msra.mxu0 0
    %405 = vmatprep.subr.bf16.mxu0 0
    %406 = vmatpush1.bf16.msra.mxu0 0
    %407 = vmatprep.subr.bf16.mxu0 0
    %408 = vmatpush1.bf16.msra.mxu0 0
    %409 = vmatprep.subr.bf16.mxu0 0
    %410 = vmatpush1.bf16.msra.mxu0 0
    %411 = vmatprep.subr.bf16.mxu0 0
    %412 = vmatpush1.bf16.msra.mxu0 0
    %413 = vmatprep.subr.bf16.mxu0 0
    %414 = vmatpush1.bf16.msra.mxu0 0
    %415 = vmatprep.mubr.bf16.mxu0 0
    %416 = vmatmul.mubr.bf16.gmra.mrb[0].mxu0 %v378
    %v417 = vpop.f32.mrb[0].mxu0
    %v418 = vadd.f32 0.0, %v417
    %v419 = vpop.f32.mrb[0].mxu0
    %v420 = vpop.f32.mrb[0].mxu0
    %v421 = vpop.f32.mrb[0].mxu0
    %422 = vdwg.mxu0
    %v423 = vrcp.pop %v372
    %v424 = vmul.f32 %v418, %v423
    %425 = vrot.lane.b32.xlu0 %v203, 112
    %v426 = vpop.permute.xlu0 %425
    %427 = vrot.lane.b32.xlu0 %v203, 80
    %v428 = vpop.permute.xlu0 %427
    %v430 = vsel %vm208, %v426, 0
    %v433 = vsel %vm208, %v428, 0
    %435 = vmatprep.subr.bf16.mxu0 0
    %436 = vmatpush1.bf16.xpose.msra.mxu0 %v433
    %437 = vmatprep.subr.bf16.mxu0 0
    %438 = vmatpush1.bf16.xpose.msra.mxu0 0
    %439 = vmatprep.subr.bf16.mxu0 0
    %440 = vmatpush1.bf16.xpose.msra.mxu0 0
    %441 = vmatprep.subr.bf16.mxu0 0
    %442 = vmatpush1.bf16.xpose.msra.mxu0 0
    %443 = vmatprep.subr.bf16.mxu0 0
    %444 = vmatpush1.bf16.xpose.msra.mxu0 0
    %445 = vmatprep.subr.bf16.mxu0 0
    %446 = vmatpush1.bf16.xpose.msra.mxu0 0
    %447 = vmatprep.subr.bf16.mxu0 0
    %448 = vmatpush1.bf16.xpose.msra.mxu0 0
    %449 = vmatprep.subr.bf16.mxu0 0
    %450 = vmatpush1.bf16.xpose.msra.mxu0 0
    %451 = vmatprep.subr.bf16.mxu0 0
    %452 = vmatpush1.bf16.xpose.msra.mxu0 0
    %453 = vmatprep.subr.bf16.mxu0 0
    %454 = vmatpush1.bf16.xpose.msra.mxu0 0
    %455 = vmatprep.subr.bf16.mxu0 0
    %456 = vmatpush1.bf16.xpose.msra.mxu0 0
    %457 = vmatprep.subr.bf16.mxu0 0
    %458 = vmatpush1.bf16.xpose.msra.mxu0 0
    %459 = vmatprep.subr.bf16.mxu0 0
    %460 = vmatpush1.bf16.xpose.msra.mxu0 0
    %461 = vmatprep.subr.bf16.mxu0 0
    %462 = vmatpush1.bf16.xpose.msra.mxu0 0
    %463 = vmatprep.subr.bf16.mxu0 0
    %464 = vmatpush1.bf16.xpose.msra.mxu0 0
    %465 = vmatprep.subr.bf16.mxu0 0
    %466 = vmatpush1.bf16.xpose.msra.mxu0 0
    %467 = vmatprep.mubr.bf16.mxu0 0
    %468 = vmatmul.mubr.bf16.gmra.mrb[0].mxu0 %v430
    %v469 = vpop.f32.mrb[0].mxu0
    %v470 = vadd.f32 0.0, %v469
    %v471 = vpop.f32.mrb[0].mxu0
    %v472 = vpop.f32.mrb[0].mxu0
    %v473 = vpop.f32.mrb[0].mxu0
    %474 = vdwg.mxu0
    %v475 = vsel %vm208, %v470, -inf
    %476 = vmax.xlane.f32.xlu0 %v475
    %v477 = vpop.xlane.xlu0 %476
    %v478 = vsub.f32 %v470, %v477
    %v479 = vmul.f32 %v478, 1.442695
    %v480 = vpow.pop %v479
    %v481 = vsel %vm208, %v480, 0.0
    %482 = vadd.xlane.f32.xlu0 %v481
    %v483 = vpop.xlane.xlu0 %482
    %v484 = vpack.c.bf16 %v480, %v480
    %485 = vrot.lane.b32.xlu0 %v204, 112
    %v486 = vpop.permute.xlu0 %485
    %v488 = vsel %vm208, %v484, 0
    %v491 = vsel %vm268, %v486, 0
    %493 = vmatprep.subr.bf16.mxu0 0
    %494 = vmatpush1.bf16.msra.mxu0 %v491
    %495 = vmatprep.subr.bf16.mxu0 0
    %496 = vmatpush1.bf16.msra.mxu0 0
    %497 = vmatprep.subr.bf16.mxu0 0
    %498 = vmatpush1.bf16.msra.mxu0 0
    %499 = vmatprep.subr.bf16.mxu0 0
    %500 = vmatpush1.bf16.msra.mxu0 0
    %501 = vmatprep.subr.bf16.mxu0 0
    %502 = vmatpush1.bf16.msra.mxu0 0
    %503 = vmatprep.subr.bf16.mxu0 0
    %504 = vmatpush1.bf16.msra.mxu0 0
    %505 = vmatprep.subr.bf16.mxu0 0
    %506 = vmatpush1.bf16.msra.mxu0 0
    %507 = vmatprep.subr.bf16.mxu0 0
    %508 = vmatpush1.bf16.msra.mxu0 0
    %509 = vmatprep.subr.bf16.mxu0 0
    %510 = vmatpush1.bf16.msra.mxu0 0
    %511 = vmatprep.subr.bf16.mxu0 0
    %512 = vmatpush1.bf16.msra.mxu0 0
    %513 = vmatprep.subr.bf16.mxu0 0
    %514 = vmatpush1.bf16.msra.mxu0 0
    %515 = vmatprep.subr.bf16.mxu0 0
    %516 = vmatpush1.bf16.msra.mxu0 0
    %517 = vmatprep.subr.bf16.mxu0 0
    %518 = vmatpush1.bf16.msra.mxu0 0
    %519 = vmatprep.subr.bf16.mxu0 0
    %520 = vmatpush1.bf16.msra.mxu0 0
    %521 = vmatprep.subr.bf16.mxu0 0
    %522 = vmatpush1.bf16.msra.mxu0 0
    %523 = vmatprep.subr.bf16.mxu0 0
    %524 = vmatpush1.bf16.msra.mxu0 0
    %525 = vmatprep.mubr.bf16.mxu0 0
    %526 = vmatmul.mubr.bf16.gmra.mrb[0].mxu0 %v488
    %v527 = vpop.f32.mrb[0].mxu0
    %v528 = vadd.f32 0.0, %v527
    %v529 = vpop.f32.mrb[0].mxu0
    %v530 = vpop.f32.mrb[0].mxu0
    %v531 = vpop.f32.mrb[0].mxu0
    %532 = vdwg.mxu0
    %v533 = vrcp.pop %v483
    %v534 = vmul.f32 %v528, %v533
    %535 = vrot.lane.b32.xlu0 %v203, 104
    %v536 = vpop.permute.xlu0 %535
    %537 = vrot.lane.b32.xlu0 %v203, 72
    %v538 = vpop.permute.xlu0 %537
    %v540 = vsel %vm208, %v536, 0
    %v543 = vsel %vm208, %v538, 0
    %545 = vmatprep.subr.bf16.mxu0 0
    %546 = vmatpush1.bf16.xpose.msra.mxu0 %v543
    %547 = vmatprep.subr.bf16.mxu0 0
    %548 = vmatpush1.bf16.xpose.msra.mxu0 0
    %549 = vmatprep.subr.bf16.mxu0 0
    %550 = vmatpush1.bf16.xpose.msra.mxu0 0
    %551 = vmatprep.subr.bf16.mxu0 0
    %552 = vmatpush1.bf16.xpose.msra.mxu0 0
    %553 = vmatprep.subr.bf16.mxu0 0
    %554 = vmatpush1.bf16.xpose.msra.mxu0 0
    %555 = vmatprep.subr.bf16.mxu0 0
    %556 = vmatpush1.bf16.xpose.msra.mxu0 0
    %557 = vmatprep.subr.bf16.mxu0 0
    %558 = vmatpush1.bf16.xpose.msra.mxu0 0
    %559 = vmatprep.subr.bf16.mxu0 0
    %560 = vmatpush1.bf16.xpose.msra.mxu0 0
    %561 = vmatprep.subr.bf16.mxu0 0
    %562 = vmatpush1.bf16.xpose.msra.mxu0 0
    %563 = vmatprep.subr.bf16.mxu0 0
    %564 = vmatpush1.bf16.xpose.msra.mxu0 0
    %565 = vmatprep.subr.bf16.mxu0 0
    %566 = vmatpush1.bf16.xpose.msra.mxu0 0
    %567 = vmatprep.subr.bf16.mxu0 0
    %568 = vmatpush1.bf16.xpose.msra.mxu0 0
    %569 = vmatprep.subr.bf16.mxu0 0
    %570 = vmatpush1.bf16.xpose.msra.mxu0 0
    %571 = vmatprep.subr.bf16.mxu0 0
    %572 = vmatpush1.bf16.xpose.msra.mxu0 0
    %573 = vmatprep.subr.bf16.mxu0 0
    %574 = vmatpush1.bf16.xpose.msra.mxu0 0
    %575 = vmatprep.subr.bf16.mxu0 0
    %576 = vmatpush1.bf16.xpose.msra.mxu0 0
    %577 = vmatprep.mubr.bf16.mxu0 0
    %578 = vmatmul.mubr.bf16.gmra.mrb[0].mxu0 %v540
    %v579 = vpop.f32.mrb[0].mxu0
    %v580 = vadd.f32 0.0, %v579
    %v581 = vpop.f32.mrb[0].mxu0
    %v582 = vpop.f32.mrb[0].mxu0
    %v583 = vpop.f32.mrb[0].mxu0
    %584 = vdwg.mxu0
    %v585 = vsel %vm208, %v580, -inf
    %586 = vmax.xlane.f32.xlu0 %v585
    %v587 = vpop.xlane.xlu0 %586
    %v588 = vsub.f32 %v580, %v587
    %v589 = vmul.f32 %v588, 1.442695
    %v590 = vpow.pop %v589
    %v591 = vsel %vm208, %v590, 0.0
    %592 = vadd.xlane.f32.xlu0 %v591
    %v593 = vpop.xlane.xlu0 %592
    %v594 = vpack.c.bf16 %v590, %v590
    %595 = vrot.lane.b32.xlu0 %v204, 104
    %v596 = vpop.permute.xlu0 %595
    %v598 = vsel %vm208, %v594, 0
    %v601 = vsel %vm268, %v596, 0
    %603 = vmatprep.subr.bf16.mxu0 0
    %604 = vmatpush1.bf16.msra.mxu0 %v601
    %605 = vmatprep.subr.bf16.mxu0 0
    %606 = vmatpush1.bf16.msra.mxu0 0
    %607 = vmatprep.subr.bf16.mxu0 0
    %608 = vmatpush1.bf16.msra.mxu0 0
    %609 = vmatprep.subr.bf16.mxu0 0
    %610 = vmatpush1.bf16.msra.mxu0 0
    %611 = vmatprep.subr.bf16.mxu0 0
    %612 = vmatpush1.bf16.msra.mxu0 0
    %613 = vmatprep.subr.bf16.mxu0 0
    %614 = vmatpush1.bf16.msra.mxu0 0
    %615 = vmatprep.subr.bf16.mxu0 0
    %616 = vmatpush1.bf16.msra.mxu0 0
    %617 = vmatprep.subr.bf16.mxu0 0
    %618 = vmatpush1.bf16.msra.mxu0 0
    %619 = vmatprep.subr.bf16.mxu0 0
    %620 = vmatpush1.bf16.msra.mxu0 0
    %621 = vmatprep.subr.bf16.mxu0 0
    %622 = vmatpush1.bf16.msra.mxu0 0
    %623 = vmatprep.subr.bf16.mxu0 0
    %624 = vmatpush1.bf16.msra.mxu0 0
    %625 = vmatprep.subr.bf16.mxu0 0
    %626 = vmatpush1.bf16.msra.mxu0 0
    %627 = vmatprep.subr.bf16.mxu0 0
    %628 = vmatpush1.bf16.msra.mxu0 0
    %629 = vmatprep.subr.bf16.mxu0 0
    %630 = vmatpush1.bf16.msra.mxu0 0
    %631 = vmatprep.subr.bf16.mxu0 0
    %632 = vmatpush1.bf16.msra.mxu0 0
    %633 = vmatprep.subr.bf16.mxu0 0
    %634 = vmatpush1.bf16.msra.mxu0 0
    %635 = vmatprep.mubr.bf16.mxu0 0
    %636 = vmatmul.mubr.bf16.gmra.mrb[0].mxu0 %v598
    %v637 = vpop.f32.mrb[0].mxu0
    %v638 = vadd.f32 0.0, %v637
    %v639 = vpop.f32.mrb[0].mxu0
    %v640 = vpop.f32.mrb[0].mxu0
    %v641 = vpop.f32.mrb[0].mxu0
    %642 = vdwg.mxu0
    %v643 = vrcp.pop %v593
    %v644 = vmul.f32 %v638, %v643
    %646 = vrot.lane.b32.xlu0 %v424, 8
    %v647 = vpop.permute.xlu0 %646
    %650 = vrot.lane.b32.xlu0 %v534, 16
    %v651 = vpop.permute.xlu0 %650
    %654 = vrot.lane.b32.xlu0 %v644, 24
    %v655 = vpop.permute.xlu0 %654
    %v657 = vsel %vm208, %v313, %v647
    %vm658 = vcmask 130048
    %v659 = vsel %vm658, %v657, %v651
    %vm660 = vcmask 195584
    %v661 = vsel %vm660, %v659, %v655
    %662 = vst.msk [vmem:[#allocation10] sm:$0xff] %vm104, %v661
    %v664 = vsel %vm104, %v81, 0
    %666 = vmatprep.subr.bf16.mxu0 0
    %667 = vmatpush1.bf16.msra.mxu0 %v100
    %668 = vmatprep.subr.bf16.mxu0 0
    %669 = vmatpush1.bf16.msra.mxu0 %v101
    %670 = vmatprep.subr.bf16.mxu0 0
    %671 = vmatpush1.bf16.msra.mxu0 0
    %672 = vmatprep.subr.bf16.mxu0 0
    %673 = vmatpush1.bf16.msra.mxu0 0
    %674 = vmatprep.subr.bf16.mxu0 0
    %675 = vmatpush1.bf16.msra.mxu0 0
    %676 = vmatprep.subr.bf16.mxu0 0
    %677 = vmatpush1.bf16.msra.mxu0 0
    %678 = vmatprep.subr.bf16.mxu0 0
    %679 = vmatpush1.bf16.msra.mxu0 0
    %680 = vmatprep.subr.bf16.mxu0 0
    %681 = vmatpush1.bf16.msra.mxu0 0
    %682 = vmatprep.subr.bf16.mxu0 0
    %683 = vmatpush1.bf16.msra.mxu0 0
    %684 = vmatprep.subr.bf16.mxu0 0
    %685 = vmatpush1.bf16.msra.mxu0 0
    %686 = vmatprep.subr.bf16.mxu0 0
    %687 = vmatpush1.bf16.msra.mxu0 0
    %688 = vmatprep.subr.bf16.mxu0 0
    %689 = vmatpush1.bf16.msra.mxu0 0
    %690 = vmatprep.subr.bf16.mxu0 0
    %691 = vmatpush1.bf16.msra.mxu0 0
    %692 = vmatprep.subr.bf16.mxu0 0
    %693 = vmatpush1.bf16.msra.mxu0 0
    %694 = vmatprep.subr.bf16.mxu0 0
    %695 = vmatpush1.bf16.msra.mxu0 0
    %696 = vmatprep.subr.bf16.mxu0 0
    %697 = vmatpush1.bf16.msra.mxu0 0
    %698 = vmatprep.mubr.bf16.mxu0 0
    %699 = vmatmul.mubr.bf16.gmra.mrb[0].mxu0 %v664
    %v700 = vpop.f32.mrb[0].mxu0
    %v701 = vadd.f32 0.0, %v700
    %v702 = vpop.f32.mrb[0].mxu0
    %v703 = vpop.f32.mrb[0].mxu0
    %v704 = vpop.f32.mrb[0].mxu0
    %705 = vdwg.mxu0
    %v707 = vsel %vm104, %v83, 0
    %709 = vmatprep.subr.bf16.mxu0 0
    %710 = vmatpush1.bf16.msra.mxu0 %v156
    %711 = vmatprep.subr.bf16.mxu0 0
    %712 = vmatpush1.bf16.msra.mxu0 %v157
    %713 = vmatprep.subr.bf16.mxu0 0
    %714 = vmatpush1.bf16.msra.mxu0 0
    %715 = vmatprep.subr.bf16.mxu0 0
    %716 = vmatpush1.bf16.msra.mxu0 0
    %717 = vmatprep.subr.bf16.mxu0 0
    %718 = vmatpush1.bf16.msra.mxu0 0
    %719 = vmatprep.subr.bf16.mxu0 0
    %720 = vmatpush1.bf16.msra.mxu0 0
    %721 = vmatprep.subr.bf16.mxu0 0
    %722 = vmatpush1.bf16.msra.mxu0 0
    %723 = vmatprep.subr.bf16.mxu0 0
    %724 = vmatpush1.bf16.msra.mxu0 0
    %725 = vmatprep.subr.bf16.mxu0 0
    %726 = vmatpush1.bf16.msra.mxu0 0
    %727 = vmatprep.subr.bf16.mxu0 0
    %728 = vmatpush1.bf16.msra.mxu0 0
    %729 = vmatprep.subr.bf16.mxu0 0
    %730 = vmatpush1.bf16.msra.mxu0 0
    %731 = vmatprep.subr.bf16.mxu0 0
    %732 = vmatpush1.bf16.msra.mxu0 0
    %733 = vmatprep.subr.bf16.mxu0 0
    %734 = vmatpush1.bf16.msra.mxu0 0
    %735 = vmatprep.subr.bf16.mxu0 0
    %736 = vmatpush1.bf16.msra.mxu0 0
    %737 = vmatprep.subr.bf16.mxu0 0
    %738 = vmatpush1.bf16.msra.mxu0 0
    %739 = vmatprep.subr.bf16.mxu0 0
    %740 = vmatpush1.bf16.msra.mxu0 0
    %741 = vmatprep.mubr.bf16.mxu0 0
    %742 = vmatmul.mubr.bf16.gmra.mrb[0].mxu0 %v707
    %v743 = vpop.f32.mrb[0].mxu0
    %v744 = vadd.f32 0.0, %v743
    %v745 = vpop.f32.mrb[0].mxu0
    %v746 = vpop.f32.mrb[0].mxu0
    %v747 = vpop.f32.mrb[0].mxu0
    %748 = vdwg.mxu0
    %v749 = vpack.c.bf16 %v701, %v701
    %v750 = vpack.c.bf16 %v744, %v744
    %752 = vrot.lane.b32.xlu0 %v749, 96
    %v753 = vpop.permute.xlu0 %752
    %v755 = vsel %vm208, %v749, 0
    %v758 = vsel %vm208, %v753, 0
    %760 = vmatprep.subr.bf16.mxu0 0
    %761 = vmatpush1.bf16.xpose.msra.mxu0 %v758
    %762 = vmatprep.subr.bf16.mxu0 0
    %763 = vmatpush1.bf16.xpose.msra.mxu0 0
    %764 = vmatprep.subr.bf16.mxu0 0
    %765 = vmatpush1.bf16.xpose.msra.mxu0 0
    %766 = vmatprep.subr.bf16.mxu0 0
    %767 = vmatpush1.bf16.xpose.msra.mxu0 0
    %768 = vmatprep.subr.bf16.mxu0 0
    %769 = vmatpush1.bf16.xpose.msra.mxu0 0
    %770 = vmatprep.subr.bf16.mxu0 0
    %771 = vmatpush1.bf16.xpose.msra.mxu0 0
    %772 = vmatprep.subr.bf16.mxu0 0
    %773 = vmatpush1.bf16.xpose.msra.mxu0 0
    %774 = vmatprep.subr.bf16.mxu0 0
    %775 = vmatpush1.bf16.xpose.msra.mxu0 0
    %776 = vmatprep.subr.bf16.mxu0 0
    %777 = vmatpush1.bf16.xpose.msra.mxu0 0
    %778 = vmatprep.subr.bf16.mxu0 0
    %779 = vmatpush1.bf16.xpose.msra.mxu0 0
    %780 = vmatprep.subr.bf16.mxu0 0
    %781 = vmatpush1.bf16.xpose.msra.mxu0 0
    %782 = vmatprep.subr.bf16.mxu0 0
    %783 = vmatpush1.bf16.xpose.msra.mxu0 0
    %784 = vmatprep.subr.bf16.mxu0 0
    %785 = vmatpush1.bf16.xpose.msra.mxu0 0
    %786 = vmatprep.subr.bf16.mxu0 0
    %787 = vmatpush1.bf16.xpose.msra.mxu0 0
    %788 = vmatprep.subr.bf16.mxu0 0
    %789 = vmatpush1.bf16.xpose.msra.mxu0 0
    %790 = vmatprep.subr.bf16.mxu0 0
    %791 = vmatpush1.bf16.xpose.msra.mxu0 0
    %792 = vmatprep.mubr.bf16.mxu0 0
    %793 = vmatmul.mubr.bf16.gmra.mrb[0].mxu0 %v755
    %v794 = vpop.f32.mrb[0].mxu0
    %v795 = vadd.f32 0.0, %v794
    %v796 = vpop.f32.mrb[0].mxu0
    %v797 = vpop.f32.mrb[0].mxu0
    %v798 = vpop.f32.mrb[0].mxu0
    %799 = vdwg.mxu0
    %v800 = vsel %vm208, %v795, -inf
    %801 = vmax.xlane.f32.xlu0 %v800
    %v802 = vpop.xlane.xlu0 %801
    %v803 = vsub.f32 %v795, %v802
    %v804 = vmul.f32 %v803, 1.442695
    %v805 = vpow.pop %v804
    %v806 = vsel %vm208, %v805, 0.0
    %807 = vadd.xlane.f32.xlu0 %v806
    %v808 = vpop.xlane.xlu0 %807
    %v809 = vpack.c.bf16 %v805, %v805
    %v811 = vsel %vm208, %v809, 0
    %v814 = vsel %vm268, %v750, 0
    %816 = vmatprep.subr.bf16.mxu0 0
    %817 = vmatpush1.bf16.msra.mxu0 %v814
    %818 = vmatprep.subr.bf16.mxu0 0
    %819 = vmatpush1.bf16.msra.mxu0 0
    %820 = vmatprep.subr.bf16.mxu0 0
    %821 = vmatpush1.bf16.msra.mxu0 0
    %822 = vmatprep.subr.bf16.mxu0 0
    %823 = vmatpush1.bf16.msra.mxu0 0
    %824 = vmatprep.subr.bf16.mxu0 0
    %825 = vmatpush1.bf16.msra.mxu0 0
    %826 = vmatprep.subr.bf16.mxu0 0
    %827 = vmatpush1.bf16.msra.mxu0 0
    %828 = vmatprep.subr.bf16.mxu0 0
    %829 = vmatpush1.bf16.msra.mxu0 0
    %830 = vmatprep.subr.bf16.mxu0 0
    %831 = vmatpush1.bf16.msra.mxu0 0
    %832 = vmatprep.subr.bf16.mxu0 0
    %833 = vmatpush1.bf16.msra.mxu0 0
    %834 = vmatprep.subr.bf16.mxu0 0
    %835 = vmatpush1.bf16.msra.mxu0 0
    %836 = vmatprep.subr.bf16.mxu0 0
    %837 = vmatpush1.bf16.msra.mxu0 0
    %838 = vmatprep.subr.bf16.mxu0 0
    %839 = vmatpush1.bf16.msra.mxu0 0
    %840 = vmatprep.subr.bf16.mxu0 0
    %841 = vmatpush1.bf16.msra.mxu0 0
    %842 = vmatprep.subr.bf16.mxu0 0
    %843 = vmatpush1.bf16.msra.mxu0 0
    %844 = vmatprep.subr.bf16.mxu0 0
    %845 = vmatpush1.bf16.msra.mxu0 0
    %846 = vmatprep.subr.bf16.mxu0 0
    %847 = vmatpush1.bf16.msra.mxu0 0
    %848 = vmatprep.mubr.bf16.mxu0 0
    %849 = vmatmul.mubr.bf16.gmra.mrb[0].mxu0 %v811
    %v850 = vpop.f32.mrb[0].mxu0
    %v851 = vadd.f32 0.0, %v850
    %v852 = vpop.f32.mrb[0].mxu0
    %v853 = vpop.f32.mrb[0].mxu0
    %v854 = vpop.f32.mrb[0].mxu0
    %855 = vdwg.mxu0
    %v856 = vrcp.pop %v808
    %v857 = vmul.f32 %v851, %v856
    %858 = vrot.lane.b32.xlu0 %v749, 120
    %v859 = vpop.permute.xlu0 %858
    %860 = vrot.lane.b32.xlu0 %v749, 88
    %v861 = vpop.permute.xlu0 %860
    %v863 = vsel %vm208, %v859, 0
    %v866 = vsel %vm208, %v861, 0
    %868 = vmatprep.subr.bf16.mxu0 0
    %869 = vmatpush1.bf16.xpose.msra.mxu0 %v866
    %870 = vmatprep.subr.bf16.mxu0 0
    %871 = vmatpush1.bf16.xpose.msra.mxu0 0
    %872 = vmatprep.subr.bf16.mxu0 0
    %873 = vmatpush1.bf16.xpose.msra.mxu0 0
    %874 = vmatprep.subr.bf16.mxu0 0
    %875 = vmatpush1.bf16.xpose.msra.mxu0 0
    %876 = vmatprep.subr.bf16.mxu0 0
    %877 = vmatpush1.bf16.xpose.msra.mxu0 0
    %878 = vmatprep.subr.bf16.mxu0 0
    %879 = vmatpush1.bf16.xpose.msra.mxu0 0
    %880 = vmatprep.subr.bf16.mxu0 0
    %881 = vmatpush1.bf16.xpose.msra.mxu0 0
    %882 = vmatprep.subr.bf16.mxu0 0
    %883 = vmatpush1.bf16.xpose.msra.mxu0 0
    %884 = vmatprep.subr.bf16.mxu0 0
    %885 = vmatpush1.bf16.xpose.msra.mxu0 0
    %886 = vmatprep.subr.bf16.mxu0 0
    %887 = vmatpush1.bf16.xpose.msra.mxu0 0
    %888 = vmatprep.subr.bf16.mxu0 0
    %889 = vmatpush1.bf16.xpose.msra.mxu0 0
    %890 = vmatprep.subr.bf16.mxu0 0
    %891 = vmatpush1.bf16.xpose.msra.mxu0 0
    %892 = vmatprep.subr.bf16.mxu0 0
    %893 = vmatpush1.bf16.xpose.msra.mxu0 0
    %894 = vmatprep.subr.bf16.mxu0 0
    %895 = vmatpush1.bf16.xpose.msra.mxu0 0
    %896 = vmatprep.subr.bf16.mxu0 0
    %897 = vmatpush1.bf16.xpose.msra.mxu0 0
    %898 = vmatprep.subr.bf16.mxu0 0
    %899 = vmatpush1.bf16.xpose.msra.mxu0 0
    %900 = vmatprep.mubr.bf16.mxu0 0
    %901 = vmatmul.mubr.bf16.gmra.mrb[0].mxu0 %v863
    %v902 = vpop.f32.mrb[0].mxu0
    %v903 = vadd.f32 0.0, %v902
    %v904 = vpop.f32.mrb[0].mxu0
    %v905 = vpop.f32.mrb[0].mxu0
    %v906 = vpop.f32.mrb[0].mxu0
    %907 = vdwg.mxu0
    %v908 = vsel %vm208, %v903, -inf
    %909 = vmax.xlane.f32.xlu0 %v908
    %v910 = vpop.xlane.xlu0 %909
    %v911 = vsub.f32 %v903, %v910
    %v912 = vmul.f32 %v911, 1.442695
    %v913 = vpow.pop %v912
    %v914 = vsel %vm208, %v913, 0.0
    %915 = vadd.xlane.f32.xlu0 %v914
    %v916 = vpop.xlane.xlu0 %915
    %v917 = vpack.c.bf16 %v913, %v913
    %919 = vrot.lane.b32.xlu0 %v750, 120
    %v920 = vpop.permute.xlu0 %919
    %v922 = vsel %vm208, %v917, 0
    %v925 = vsel %vm268, %v920, 0
    %927 = vmatprep.subr.bf16.mxu0 0
    %928 = vmatpush1.bf16.msra.mxu0 %v925
    %929 = vmatprep.subr.bf16.mxu0 0
    %930 = vmatpush1.bf16.msra.mxu0 0
    %931 = vmatprep.subr.bf16.mxu0 0
    %932 = vmatpush1.bf16.msra.mxu0 0
    %933 = vmatprep.subr.bf16.mxu0 0
    %934 = vmatpush1.bf16.msra.mxu0 0
    %935 = vmatprep.subr.bf16.mxu0 0
    %936 = vmatpush1.bf16.msra.mxu0 0
    %937 = vmatprep.subr.bf16.mxu0 0
    %938 = vmatpush1.bf16.msra.mxu0 0
    %939 = vmatprep.subr.bf16.mxu0 0
    %940 = vmatpush1.bf16.msra.mxu0 0
    %941 = vmatprep.subr.bf16.mxu0 0
    %942 = vmatpush1.bf16.msra.mxu0 0
    %943 = vmatprep.subr.bf16.mxu0 0
    %944 = vmatpush1.bf16.msra.mxu0 0
    %945 = vmatprep.subr.bf16.mxu0 0
    %946 = vmatpush1.bf16.msra.mxu0 0
    %947 = vmatprep.subr.bf16.mxu0 0
    %948 = vmatpush1.bf16.msra.mxu0 0
    %949 = vmatprep.subr.bf16.mxu0 0
    %950 = vmatpush1.bf16.msra.mxu0 0
    %951 = vmatprep.subr.bf16.mxu0 0
    %952 = vmatpush1.bf16.msra.mxu0 0
    %953 = vmatprep.subr.bf16.mxu0 0
    %954 = vmatpush1.bf16.msra.mxu0 0
    %955 = vmatprep.subr.bf16.mxu0 0
    %956 = vmatpush1.bf16.msra.mxu0 0
    %957 = vmatprep.subr.bf16.mxu0 0
    %958 = vmatpush1.bf16.msra.mxu0 0
    %959 = vmatprep.mubr.bf16.mxu0 0
    %960 = vmatmul.mubr.bf16.gmra.mrb[0].mxu0 %v922
    %v961 = vpop.f32.mrb[0].mxu0
    %v962 = vadd.f32 0.0, %v961
    %v963 = vpop.f32.mrb[0].mxu0
    %v964 = vpop.f32.mrb[0].mxu0
    %v965 = vpop.f32.mrb[0].mxu0
    %966 = vdwg.mxu0
    %v967 = vrcp.pop %v916
    %v968 = vmul.f32 %v962, %v967
    %969 = vrot.lane.b32.xlu0 %v749, 112
    %v970 = vpop.permute.xlu0 %969
    %971 = vrot.lane.b32.xlu0 %v749, 80
    %v972 = vpop.permute.xlu0 %971
    %v974 = vsel %vm208, %v970, 0
    %v977 = vsel %vm208, %v972, 0
    %979 = vmatprep.subr.bf16.mxu0 0
    %980 = vmatpush1.bf16.xpose.msra.mxu0 %v977
    %981 = vmatprep.subr.bf16.mxu0 0
    %982 = vmatpush1.bf16.xpose.msra.mxu0 0
    %983 = vmatprep.subr.bf16.mxu0 0
    %984 = vmatpush1.bf16.xpose.msra.mxu0 0
    %985 = vmatprep.subr.bf16.mxu0 0
    %986 = vmatpush1.bf16.xpose.msra.mxu0 0
    %987 = vmatprep.subr.bf16.mxu0 0
    %988 = vmatpush1.bf16.xpose.msra.mxu0 0
    %989 = vmatprep.subr.bf16.mxu0 0
    %990 = vmatpush1.bf16.xpose.msra.mxu0 0
    %991 = vmatprep.subr.bf16.mxu0 0
    %992 = vmatpush1.bf16.xpose.msra.mxu0 0
    %993 = vmatprep.subr.bf16.mxu0 0
    %994 = vmatpush1.bf16.xpose.msra.mxu0 0
    %995 = vmatprep.subr.bf16.mxu0 0
    %996 = vmatpush1.bf16.xpose.msra.mxu0 0
    %997 = vmatprep.subr.bf16.mxu0 0
    %998 = vmatpush1.bf16.xpose.msra.mxu0 0
    %999 = vmatprep.subr.bf16.mxu0 0
    %1000 = vmatpush1.bf16.xpose.msra.mxu0 0
    %1001 = vmatprep.subr.bf16.mxu0 0
    %1002 = vmatpush1.bf16.xpose.msra.mxu0 0
    %1003 = vmatprep.subr.bf16.mxu0 0
    %1004 = vmatpush1.bf16.xpose.msra.mxu0 0
    %1005 = vmatprep.subr.bf16.mxu0 0
    %1006 = vmatpush1.bf16.xpose.msra.mxu0 0
    %1007 = vmatprep.subr.bf16.mxu0 0
    %1008 = vmatpush1.bf16.xpose.msra.mxu0 0
    %1009 = vmatprep.subr.bf16.mxu0 0
    %1010 = vmatpush1.bf16.xpose.msra.mxu0 0
    %1011 = vmatprep.mubr.bf16.mxu0 0
    %1012 = vmatmul.mubr.bf16.gmra.mrb[0].mxu0 %v974
    %v1013 = vpop.f32.mrb[0].mxu0
    %v1014 = vadd.f32 0.0, %v1013
    %v1015 = vpop.f32.mrb[0].mxu0
    %v1016 = vpop.f32.mrb[0].mxu0
    %v1017 = vpop.f32.mrb[0].mxu0
    %1018 = vdwg.mxu0
    %v1019 = vsel %vm208, %v1014, -inf
    %1020 = vmax.xlane.f32.xlu0 %v1019
    %v1021 = vpop.xlane.xlu0 %1020
    %v1022 = vsub.f32 %v1014, %v1021
    %v1023 = vmul.f32 %v1022, 1.442695
    %v1024 = vpow.pop %v1023
    %v1025 = vsel %vm208, %v1024, 0.0
    %1026 = vadd.xlane.f32.xlu0 %v1025
    %v1027 = vpop.xlane.xlu0 %1026
    %v1028 = vpack.c.bf16 %v1024, %v1024
    %1029 = vrot.lane.b32.xlu0 %v750, 112
    %v1030 = vpop.permute.xlu0 %1029
    %v1032 = vsel %vm208, %v1028, 0
    %v1035 = vsel %vm268, %v1030, 0
    %1037 = vmatprep.subr.bf16.mxu0 0
    %1038 = vmatpush1.bf16.msra.mxu0 %v1035
    %1039 = vmatprep.subr.bf16.mxu0 0
    %1040 = vmatpush1.bf16.msra.mxu0 0
    %1041 = vmatprep.subr.bf16.mxu0 0
    %1042 = vmatpush1.bf16.msra.mxu0 0
    %1043 = vmatprep.subr.bf16.mxu0 0
    %1044 = vmatpush1.bf16.msra.mxu0 0
    %1045 = vmatprep.subr.bf16.mxu0 0
    %1046 = vmatpush1.bf16.msra.mxu0 0
    %1047 = vmatprep.subr.bf16.mxu0 0
    %1048 = vmatpush1.bf16.msra.mxu0 0
    %1049 = vmatprep.subr.bf16.mxu0 0
    %1050 = vmatpush1.bf16.msra.mxu0 0
    %1051 = vmatprep.subr.bf16.mxu0 0
    %1052 = vmatpush1.bf16.msra.mxu0 0
    %1053 = vmatprep.subr.bf16.mxu0 0
    %1054 = vmatpush1.bf16.msra.mxu0 0
    %1055 = vmatprep.subr.bf16.mxu0 0
    %1056 = vmatpush1.bf16.msra.mxu0 0
    %1057 = vmatprep.subr.bf16.mxu0 0
    %1058 = vmatpush1.bf16.msra.mxu0 0
    %1059 = vmatprep.subr.bf16.mxu0 0
    %1060 = vmatpush1.bf16.msra.mxu0 0
    %1061 = vmatprep.subr.bf16.mxu0 0
    %1062 = vmatpush1.bf16.msra.mxu0 0
    %1063 = vmatprep.subr.bf16.mxu0 0
    %1064 = vmatpush1.bf16.msra.mxu0 0
    %1065 = vmatprep.subr.bf16.mxu0 0
    %1066 = vmatpush1.bf16.msra.mxu0 0
    %1067 = vmatprep.subr.bf16.mxu0 0
    %1068 = vmatpush1.bf16.msra.mxu0 0
    %1069 = vmatprep.mubr.bf16.mxu0 0
    %1070 = vmatmul.mubr.bf16.gmra.mrb[0].mxu0 %v1032
    %v1071 = vpop.f32.mrb[0].mxu0
    %v1072 = vadd.f32 0.0, %v1071
    %v1073 = vpop.f32.mrb[0].mxu0
    %v1074 = vpop.f32.mrb[0].mxu0
    %v1075 = vpop.f32.mrb[0].mxu0
    %1076 = vdwg.mxu0
    %v1077 = vrcp.pop %v1027
    %v1078 = vmul.f32 %v1072, %v1077
    %1079 = vrot.lane.b32.xlu0 %v749, 104
    %v1080 = vpop.permute.xlu0 %1079
    %1081 = vrot.lane.b32.xlu0 %v749, 72
    %v1082 = vpop.permute.xlu0 %1081
    %v1084 = vsel %vm208, %v1080, 0
    %v1087 = vsel %vm208, %v1082, 0
    %1089 = vmatprep.subr.bf16.mxu0 0
    %1090 = vmatpush1.bf16.xpose.msra.mxu0 %v1087
    %1091 = vmatprep.subr.bf16.mxu0 0
    %1092 = vmatpush1.bf16.xpose.msra.mxu0 0
    %1093 = vmatprep.subr.bf16.mxu0 0
    %1094 = vmatpush1.bf16.xpose.msra.mxu0 0
    %1095 = vmatprep.subr.bf16.mxu0 0
    %1096 = vmatpush1.bf16.xpose.msra.mxu0 0
    %1097 = vmatprep.subr.bf16.mxu0 0
    %1098 = vmatpush1.bf16.xpose.msra.mxu0 0
    %1099 = vmatprep.subr.bf16.mxu0 0
    %1100 = vmatpush1.bf16.xpose.msra.mxu0 0
    %1101 = vmatprep.subr.bf16.mxu0 0
    %1102 = vmatpush1.bf16.xpose.msra.mxu0 0
    %1103 = vmatprep.subr.bf16.mxu0 0
    %1104 = vmatpush1.bf16.xpose.msra.mxu0 0
    %1105 = vmatprep.subr.bf16.mxu0 0
    %1106 = vmatpush1.bf16.xpose.msra.mxu0 0
    %1107 = vmatprep.subr.bf16.mxu0 0
    %1108 = vmatpush1.bf16.xpose.msra.mxu0 0
    %1109 = vmatprep.subr.bf16.mxu0 0
    %1110 = vmatpush1.bf16.xpose.msra.mxu0 0
    %1111 = vmatprep.subr.bf16.mxu0 0
    %1112 = vmatpush1.bf16.xpose.msra.mxu0 0
    %1113 = vmatprep.subr.bf16.mxu0 0
    %1114 = vmatpush1.bf16.xpose.msra.mxu0 0
    %1115 = vmatprep.subr.bf16.mxu0 0
    %1116 = vmatpush1.bf16.xpose.msra.mxu0 0
    %1117 = vmatprep.subr.bf16.mxu0 0
    %1118 = vmatpush1.bf16.xpose.msra.mxu0 0
    %1119 = vmatprep.subr.bf16.mxu0 0
    %1120 = vmatpush1.bf16.xpose.msra.mxu0 0
    %1121 = vmatprep.mubr.bf16.mxu0 0
    %1122 = vmatmul.mubr.bf16.gmra.mrb[0].mxu0 %v1084
    %v1123 = vpop.f32.mrb[0].mxu0
    %v1124 = vadd.f32 0.0, %v1123
    %v1125 = vpop.f32.mrb[0].mxu0
    %v1126 = vpop.f32.mrb[0].mxu0
    %v1127 = vpop.f32.mrb[0].mxu0
    %1128 = vdwg.mxu0
    %v1129 = vsel %vm208, %v1124, -inf
    %1130 = vmax.xlane.f32.xlu0 %v1129
    %v1131 = vpop.xlane.xlu0 %1130
    %v1132 = vsub.f32 %v1124, %v1131
    %v1133 = vmul.f32 %v1132, 1.442695
    %v1134 = vpow.pop %v1133
    %v1135 = vsel %vm208, %v1134, 0.0
    %1136 = vadd.xlane.f32.xlu0 %v1135
    %v1137 = vpop.xlane.xlu0 %1136
    %v1138 = vpack.c.bf16 %v1134, %v1134
    %1139 = vrot.lane.b32.xlu0 %v750, 104
    %v1140 = vpop.permute.xlu0 %1139
    %v1142 = vsel %vm208, %v1138, 0
    %v1145 = vsel %vm268, %v1140, 0
    %1147 = vmatprep.subr.bf16.mxu0 0
    %1148 = vmatpush1.bf16.msra.mxu0 %v1145
    %1149 = vmatprep.subr.bf16.mxu0 0
    %1150 = vmatpush1.bf16.msra.mxu0 0
    %1151 = vmatprep.subr.bf16.mxu0 0
    %1152 = vmatpush1.bf16.msra.mxu0 0
    %1153 = vmatprep.subr.bf16.mxu0 0
    %1154 = vmatpush1.bf16.msra.mxu0 0
    %1155 = vmatprep.subr.bf16.mxu0 0
    %1156 = vmatpush1.bf16.msra.mxu0 0
    %1157 = vmatprep.subr.bf16.mxu0 0
    %1158 = vmatpush1.bf16.msra.mxu0 0
    %1159 = vmatprep.subr.bf16.mxu0 0
    %1160 = vmatpush1.bf16.msra.mxu0 0
    %1161 = vmatprep.subr.bf16.mxu0 0
    %1162 = vmatpush1.bf16.msra.mxu0 0
    %1163 = vmatprep.subr.bf16.mxu0 0
    %1164 = vmatpush1.bf16.msra.mxu0 0
    %1165 = vmatprep.subr.bf16.mxu0 0
    %1166 = vmatpush1.bf16.msra.mxu0 0
    %1167 = vmatprep.subr.bf16.mxu0 0
    %1168 = vmatpush1.bf16.msra.mxu0 0
    %1169 = vmatprep.subr.bf16.mxu0 0
    %1170 = vmatpush1.bf16.msra.mxu0 0
    %1171 = vmatprep.subr.bf16.mxu0 0
    %1172 = vmatpush1.bf16.msra.mxu0 0
    %1173 = vmatprep.subr.bf16.mxu0 0
    %1174 = vmatpush1.bf16.msra.mxu0 0
    %1175 = vmatprep.subr.bf16.mxu0 0
    %1176 = vmatpush1.bf16.msra.mxu0 0
    %1177 = vmatprep.subr.bf16.mxu0 0
    %1178 = vmatpush1.bf16.msra.mxu0 0
    %1179 = vmatprep.mubr.bf16.mxu0 0
    %1180 = vmatmul.mubr.bf16.gmra.mrb[0].mxu0 %v1142
    %v1181 = vpop.f32.mrb[0].mxu0
    %v1182 = vadd.f32 0.0, %v1181
    %v1183 = vpop.f32.mrb[0].mxu0
    %v1184 = vpop.f32.mrb[0].mxu0
    %v1185 = vpop.f32.mrb[0].mxu0
    %1186 = vdwg.mxu0
    %v1187 = vrcp.pop %v1137
    %v1188 = vmul.f32 %v1182, %v1187
    %1190 = vrot.lane.b32.xlu0 %v968, 8
    %v1191 = vpop.permute.xlu0 %1190
    %1194 = vrot.lane.b32.xlu0 %v1078, 16
    %v1195 = vpop.permute.xlu0 %1194
    %1198 = vrot.lane.b32.xlu0 %v1188, 24
    %v1199 = vpop.permute.xlu0 %1198
    %v1201 = vsel %vm208, %v857, %v1191
    %v1202 = vsel %vm658, %v1201, %v1195
    %v1203 = vsel %vm660, %v1202, %v1199
    %s1204 = scalar_lea.vmem [#allocation10], 8
    %1205 = vst.msk [vmem:[%s1204] sm:$0xff] %vm104, %v1203
    // Predicated region
    $region34: #{tpu_custom_call.1} parent=1 // pred_check
      _
    $region35: #{tpu_custom_call.1} parent=1 // pred_check_branch
      %1207 = sbr.rel (0) target = $region37
    $region36: #{tpu_custom_call.1} parent=1 // pred_region
      %s1209 = ssub.s32 256, 256
      %1210 = vsyncadd [#allocation4], %s1209
      %s1211 = sshll.u32 [#allocation10], 4
      %s1212 = int_to_ptr.vmem [resolvable:$true] %s1211
      %1217 = dma.vmem_to_hbm [thread:$0]  %s1212, 256, %s4, [#allocation4], 128, 128, 8
    $region37: #{tpu_custom_call.1} parent=1 // pred_fallthru
      _
    // Predicated region
    $region38: #{tpu_custom_call.1} parent=1 // pred_check
      _
    $region39: #{tpu_custom_call.1} parent=1 // pred_check_branch
      %1219 = sbr.rel (0) target = $region41
    $region40: #{tpu_custom_call.1} parent=1 // pred_region
      %1220 = dma.done [#allocation4], 256
    $region41: #{tpu_custom_call.1} parent=1 // pred_fallthru
      _
    %1221 = vsyncpa [#allocation3], 1
    %1222 = vsyncpa [#allocation6], 1
    %1223 = vsyncpa [#allocation9], 1
    %1224 = vsyncpa [#allocation4], 1

</llo_original>
